<compile_context>
chip_gen: v6e
topology: v6e:2x2x1
jax: 0.10.0
libtpu: 0.0.40
codegen_flags: <defaults>
</compile_context>

<pallas_src>
import math

import jax
import jax.numpy as jnp
from jax import lax
from jax.experimental import pallas as pl
from jax.experimental.pallas import tpu as pltpu


# ---------------------------------------------------------------------------
# Helpers
# ---------------------------------------------------------------------------
def _vmem_limit_bytes():
    """Scoped-VMEM budget: ~3/4 of physical, capped at 100 MiB."""
    try:
        cap = pltpu.get_tpu_info().vmem_capacity_bytes
    except Exception:  # emulator / older runtime: assume the smallest (v7x) part
        cap = 64 * 1024 * 1024
    return int(min(cap * 3 // 4, 100 * 1024 * 1024))


def _pick_tile(dim, pref, align):
    """Largest multiple of `align` that divides `dim` and is <= pref.

    Falls back to the full dim only when the dim is already <= pref or has no
    aligned divisor (full-dim blocks always satisfy the (8,128) rule).
    """
    if dim <= pref:
        return dim
    t = (pref // align) * align
    while t >= align:
        if dim % t == 0:
            return t
        t -= align
    # TODO(synk): pad-to-multiple edge tiles for dims with no aligned divisor.
    return dim


# ---------------------------------------------------------------------------
# Tiled linear:  y = x @ W + b   (bf16/f32 operands, f32 accumulation)
# ---------------------------------------------------------------------------
def _linear_kernel(x_ref, w_ref, b_ref, o_ref, acc_ref):
    k = pl.program_id(2)

    @pl.when(k == 0)
    def _init():
        acc_ref[...] = jnp.zeros_like(acc_ref)

    acc_ref[...] += jnp.dot(x_ref[...], w_ref[...],
                            preferred_element_type=jnp.float32)

    @pl.when(k == pl.num_programs(2) - 1)
    def _finalize():
        o_ref[...] = (acc_ref[...] + b_ref[...]).astype(o_ref.dtype)


def _linear(x, w, b, *, out_dtype, tm_pref=512, tn_pref=512, tk_pref=1024):
    M, K = x.shape
    N = w.shape[1]
    sub_align = max(8, 32 // x.dtype.itemsize)        # 8 for f32, 16 for bf16
    tm = _pick_tile(M, tm_pref, sub_align)
    tn = _pick_tile(N, tn_pref, 128)
    tk = _pick_tile(K, tk_pref, 128)
    itemsize = x.dtype.itemsize
    return pl.pallas_call(
        _linear_kernel,
        out_shape=jax.ShapeDtypeStruct((M, N), out_dtype),
        grid=(M // tm, N // tn, K // tk),
        in_specs=[
            pl.BlockSpec((tm, tk), lambda i, j, k: (i, k)),
            pl.BlockSpec((tk, tn), lambda i, j, k: (k, j)),
            pl.BlockSpec((1, tn), lambda i, j, k: (0, j)),
        ],
        out_specs=pl.BlockSpec((tm, tn), lambda i, j, k: (i, j)),
        scratch_shapes=[pltpu.VMEM((tm, tn), jnp.float32)],
        compiler_params=pltpu.CompilerParams(
            dimension_semantics=("parallel", "parallel", "arbitrary"),
            vmem_limit_bytes=_vmem_limit_bytes()),
        cost_estimate=pl.CostEstimate(
            flops=2 * M * N * K,
            transcendentals=0,
            bytes_accessed=itemsize * (M * K + K * N + M * N)),
    )(x, w, b.reshape(1, N))


# ---------------------------------------------------------------------------
# Attention: grid = (batch, head, q-tile, kv-chunk), online softmax over kv
# ---------------------------------------------------------------------------
def _attention_kernel(q_ref, k_ref, v_ref, mask_ref, o_ref, m_sc, l_sc, acc_sc):
    kc = pl.program_id(3)

    @pl.when(kc == 0)
    def _init():
        m_sc[...] = jnp.full_like(m_sc, -jnp.inf)
        l_sc[...] = jnp.zeros_like(l_sc)
        acc_sc[...] = jnp.zeros_like(acc_sc)

    q = q_ref[0]          # [TQ, hd]   (1/sqrt(hd) already folded into Wq)
    k = k_ref[0]          # [Tk, hd]
    v = v_ref[0]          # [Tk, hd]
    m = mask_ref[0, 0]    # [TQ, Tk]   int8 (1 = keep, 0 = drop)

    # Contract both operands on their last (lane) dim -> no in-kernel k.T.
    s = lax.dot_general(q, k, (((1,), (1,)), ((), ())),
                        preferred_element_type=jnp.float32)

    # Binary mask: single select replaces scores*m - 1e4*(1-m).
    # TODO(synk): non-binary masks and length-derived (iota) masks not handled.
    s = jnp.where(m != 0, s, -10000.0)

    # Online (flash-style) softmax accumulation across KV chunks (all f32).
    m_prev = m_sc[...]                                        # [TQ, 1]
    m_new = jnp.maximum(m_prev, jnp.max(s, axis=-1, keepdims=True))
    alpha = jnp.exp(m_prev - m_new)
    p = jnp.exp(s - m_new)                                    # [TQ, Tk] f32
    l_sc[...] = alpha * l_sc[...] + jnp.sum(p, axis=-1, keepdims=True)
    acc_sc[...] = alpha * acc_sc[...] + jnp.dot(
        p.astype(v.dtype), v, preferred_element_type=jnp.float32)
    m_sc[...] = m_new

    # TODO(synk): attention_dropout / output_dropout are identity (eval / prob=0);
    # no get_cuda_rng_tracker().fork() equivalent is applied.

    @pl.when(kc == pl.num_programs(3) - 1)
    def _finalize():
        inv_l = pl.reciprocal(l_sc[...], approx=True)         # EUP slot, ~free
        o_ref[0] = (acc_sc[...] * inv_l).astype(o_ref.dtype)


# ---------------------------------------------------------------------------
# Forward wrapper
# ---------------------------------------------------------------------------
def cross_attention_forward(hidden_states, encoder_states, cross_mask, params,
                            num_heads, compute_dtype=jnp.bfloat16):
    out_dtype = hidden_states.dtype
    B, Sq, H = hidden_states.shape
    _, Sk, _ = encoder_states.shape
    hd = H // num_heads
    assert hd * num_heads == H
    # Direct head slicing out of [B, S, H] needs lane-aligned heads.
    # TODO(synk): add a head-transposed fallback path for hd not a multiple of 128.
    assert hd % 128 == 0, "head_dim must be a multiple of 128 for lane-sliced heads"

    # Fold 1/sqrt(hd) into the Q projection (removes per-KV-chunk rescale in-kernel).
    inv_sqrt = 1.0 / math.sqrt(hd)
    wq = (params["wq"] * inv_sqrt).astype(compute_dtype)
    bq = (params["bq"] * inv_sqrt).astype(jnp.float32)
    wkv = params["wkv"].astype(compute_dtype)
    bkv = params["bkv"].astype(jnp.float32)
    wd = params["wd"].astype(compute_dtype)
    bd = params["bd"].astype(jnp.float32)

    x = hidden_states.astype(compute_dtype)
    e = encoder_states.astype(compute_dtype)

    # Q / KV projections (tiled, K-accumulating Pallas matmuls; bf16 intermediates).
    q = _linear(x.reshape(B * Sq, H), wq, bq,
                out_dtype=compute_dtype).reshape(B, Sq, H)
    kv = _linear(e.reshape(B * Sk, H), wkv, bkv,
                 out_dtype=compute_dtype).reshape(B, Sk, 2 * H)

    # int8 mask: 4x less mask DMA than f32 (it is still re-streamed per head).
    # TODO(synk): derive the mask in-kernel from per-batch key lengths (scalar
    # prefetch + iota) to eliminate the mask stream entirely when lengths suffice.
    mask_i8 = (cross_mask != 0).astype(jnp.int8)

    tq = _pick_tile(Sq, 256, 32)       # 32-aligned: safe for bf16 Q and int8 mask
    kv_chunk = _pick_tile(Sk, 512, 128)
    n_q = Sq // tq
    n_kv = Sk // kv_chunk
    itemsize = jnp.dtype(compute_dtype).itemsize

    # Heads are sliced directly out of [B,Sq,H] / [B,Sk,2H] by the BlockSpec index
    # maps (K = first H lanes of kv, V = second H lanes); output is written straight
    # back into [B,Sq,H] -> no wrapper-side split/merge-head transposes.
    # TODO(synk): G=2 head pairing to fill the 256-wide MXU N-dim on v6e/v7x.
    ctx = pl.pallas_call(
        _attention_kernel,
        out_shape=jax.ShapeDtypeStruct((B, Sq, H), compute_dtype),
        grid=(B, num_heads, n_q, n_kv),
        in_specs=[
            pl.BlockSpec((1, tq, hd), lambda b, h, qi, kc: (b, qi, h)),
            pl.BlockSpec((1, kv_chunk, hd), lambda b, h, qi, kc: (b, kc, h)),
            pl.BlockSpec((1, kv_chunk, hd),
                         lambda b, h, qi, kc: (b, kc, num_heads + h)),
            # mask shared by all heads: index head -> block 0 (no broadcast copy)
            pl.BlockSpec((1, 1, tq, kv_chunk),
                         lambda b, h, qi, kc: (b, 0, qi, kc)),
        ],
        out_specs=pl.BlockSpec((1, tq, hd), lambda b, h, qi, kc: (b, qi, h)),
        scratch_shapes=[
            pltpu.VMEM((tq, 1), jnp.float32),   # running max
            pltpu.VMEM((tq, 1), jnp.float32),   # running denom
            pltpu.VMEM((tq, hd), jnp.float32),  # running context accumulator
        ],
        compiler_params=pltpu.CompilerParams(
            dimension_semantics=("parallel", "parallel", "parallel", "arbitrary"),
            vmem_limit_bytes=_vmem_limit_bytes()),
        cost_estimate=pl.CostEstimate(
            flops=4 * B * num_heads * Sq * Sk * hd,
            transcendentals=B * num_heads * Sq * Sk,
            # Q read once per (b,h,qi); K/V re-streamed per q-tile; int8 mask
            # re-streamed per head; ctx written once.
            bytes_accessed=itemsize * (2 * B * Sq * H + n_q * 2 * B * Sk * H)
                           + B * num_heads * Sq * Sk),
    )(q, kv, kv, mask_i8)

    # Output dense projection back to the caller's dtype.
    out = _linear(ctx.reshape(B * Sq, H), wd, bd, out_dtype=out_dtype)
    return out.reshape(B, Sq, H)


# ---------------------------------------------------------------------------
# Pure-JAX reference (original mask formula, standard softmax, f32)
# ---------------------------------------------------------------------------
def _reference(hidden_states, encoder_states, cross_mask, params, num_heads):
    B, Sq, H = hidden_states.shape
    _, Sk, _ = encoder_states.shape
    hd = H // num_heads
    q = hidden_states @ params["wq"] + params["bq"]
    kv = encoder_states @ params["wkv"] + params["bkv"]
    k, v = kv[..., :H], kv[..., H:]
    sh = lambda x, s: x.reshape(B, s, num_heads, hd).transpose(0, 2, 1, 3)
    ql, kl, vl = sh(q, Sq), sh(k, Sk), sh(v, Sk)
    scores = jnp.einsum("bhqd,bhkd->bhqk", ql, kl) / math.sqrt(hd)
    m = jnp.broadcast_to(cross_mask, scores.shape).astype(jnp.float32)
    scores = scores * m - 10000.0 * (1.0 - m)
    p = jax.nn.softmax(scores, axis=-1)
    ctx = jnp.einsum("bhqk,bhkd->bhqd", p, vl)
    ctx = ctx.transpose(0, 2, 1, 3).reshape(B, Sq, H)
    return ctx @ params["wd"] + params["bd"]


# ---------------------------------------------------------------------------
if __name__ == "__main__":
    # hd = H / NH = 128 so heads are lane-sliced directly out of the [B,S,H] layouts.
    B, Sq, Sk, H, NH = 2, 8, 8, 256, 2
    key = jax.random.PRNGKey(0)
    ks = jax.random.split(key, 10)
    scale = 0.02

    params = {
        "wq":  scale * jax.random.normal(ks[0], (H, H),     jnp.float32),
        "bq":  scale * jax.random.normal(ks[1], (H,),       jnp.float32),
        "wkv": scale * jax.random.normal(ks[2], (H, 2 * H), jnp.float32),
        "bkv": scale * jax.random.normal(ks[3], (2 * H,),   jnp.float32),
        "wd":  scale * jax.random.normal(ks[4], (H, H),     jnp.float32),
        "bd":  scale * jax.random.normal(ks[5], (H,),       jnp.float32),
    }

    hidden_states  = jax.random.normal(ks[6], (B, Sq, H), jnp.float32)
    encoder_states = jax.random.normal(ks[7], (B, Sk, H), jnp.float32)
    cross_mask = (jax.random.uniform(ks[8], (B, 1, Sq, Sk)) > 0.2).astype(jnp.float32)

    fwd = jax.jit(cross_attention_forward,
                  static_argnames=("num_heads", "compute_dtype"))
    ref = _reference(hidden_states, encoder_states, cross_mask, params, NH)

    # f32 compute path: tight tolerance (covers approx-reciprocal softmax denom).
    out_f32 = jax.block_until_ready(
        fwd(hidden_states, encoder_states, cross_mask, params,
            num_heads=NH, compute_dtype=jnp.float32))
    assert out_f32.shape == (B, Sq, H)
    assert jnp.allclose(out_f32, ref, atol=2e-3, rtol=2e-3), float(
        jnp.max(jnp.abs(out_f32 - ref)))

    # Default bf16 compute path (MXU fast path): looser tolerance.
    out = jax.block_until_ready(
        fwd(hidden_states, encoder_states, cross_mask, params, num_heads=NH))
    assert out.shape == (B, Sq, H)
    assert jnp.allclose(out, ref, atol=3e-2, rtol=3e-2), float(
        jnp.max(jnp.abs(out - ref)))

    print("KERNEL_OK")
</pallas_src>

<mosaic_0001>
module attributes {stable_mosaic.version = 11 : i64} {
  func.func @_linear_kernel(%arg0: i32, %arg1: i32, %arg2: i32, %arg3: memref<16x256xf32, #tpu.memory_space<vmem>>, %arg4: memref<256x256xf32, #tpu.memory_space<vmem>>, %arg5: memref<1x256xf32, #tpu.memory_space<vmem>>, %arg6: memref<16x256xf32, #tpu.memory_space<vmem>>, %arg7: memref<16x256xf32, #tpu.memory_space<vmem>>) attributes {dimension_semantics = [#tpu.dimension_semantics<parallel>, #tpu.dimension_semantics<parallel>, #tpu.dimension_semantics<arbitrary>], iteration_bounds = array<i64: 1, 1, 1>, scalar_prefetch = 0 : i64, scratch_operands = 1 : i64, tpu.core_type = #tpu.core_type<tc>, window_params = [{transform_indices = @transform_0, window_bounds = array<i64: 16, 256>}, {transform_indices = @transform_1, window_bounds = array<i64: 256, 256>}, {transform_indices = @transform_2, window_bounds = array<i64: 1, 256>}, {transform_indices = @transform_3, window_bounds = array<i64: 16, 256>}]} {
    %c0_i32 = arith.constant 0 : i32
    %0 = arith.cmpi eq, %arg2, %c0_i32 : i32
    %1 = arith.extui %0 : i1 to i32
    %c0_i32_0 = arith.constant 0 : i32
    %2 = arith.cmpi ne, %1, %c0_i32_0 : i32
    scf.if %2 {
      %cst_10 = arith.constant 0.000000e+00 : f32
      %12 = vector.broadcast %cst_10 : f32 to vector<16x256xf32>
      %c0_11 = arith.constant 0 : index
      %c0_12 = arith.constant 0 : index
      %13 = vector.load %arg7[%c0_11, %c0_12] : memref<16x256xf32, #tpu.memory_space<vmem>>, vector<16x256xf32>
      tpu.vector_store %arg7[%c0_11, %c0_12], %12 {strides = array<i32>} : memref<16x256xf32, #tpu.memory_space<vmem>>, vector<16x256xf32>,
    } else {
    }
    %c0 = arith.constant 0 : index
    %c0_1 = arith.constant 0 : index
    %3 = vector.load %arg7[%c0, %c0_1] : memref<16x256xf32, #tpu.memory_space<vmem>>, vector<16x256xf32>
    %c0_2 = arith.constant 0 : index
    %c0_3 = arith.constant 0 : index
    %4 = vector.load %arg3[%c0_2, %c0_3] : memref<16x256xf32, #tpu.memory_space<vmem>>, vector<16x256xf32>
    %c0_4 = arith.constant 0 : index
    %c0_5 = arith.constant 0 : index
    %5 = vector.load %arg4[%c0_4, %c0_5] : memref<256x256xf32, #tpu.memory_space<vmem>>, vector<256x256xf32>
    %cst = arith.constant dense<0.000000e+00> : vector<16x256xf32>
    %6 = tpu.matmul %4, %5, %cst {dimension_numbers = #tpu.dot_dimension_numbers<[1], [0], [0], [1], [0, 0, 1, 1], [], []>} : vector<16x256xf32>, vector<256x256xf32>, vector<16x256xf32> -> vector<16x256xf32>
    %7 = arith.addf %3, %6 : vector<16x256xf32>
    %c0_6 = arith.constant 0 : index
    %c0_7 = arith.constant 0 : index
    %8 = vector.load %arg7[%c0_6, %c0_7] : memref<16x256xf32, #tpu.memory_space<vmem>>, vector<16x256xf32>
    tpu.vector_store %arg7[%c0_6, %c0_7], %7 {strides = array<i32>} : memref<16x256xf32, #tpu.memory_space<vmem>>, vector<16x256xf32>,
    %c0_i32_8 = arith.constant 0 : i32
    %9 = arith.cmpi eq, %arg2, %c0_i32_8 : i32
    %10 = arith.extui %9 : i1 to i32
    %c0_i32_9 = arith.constant 0 : i32
    %11 = arith.cmpi ne, %10, %c0_i32_9 : i32
    scf.if %11 {
      %c0_10 = arith.constant 0 : index
      %c0_11 = arith.constant 0 : index
      %12 = vector.load %arg7[%c0_10, %c0_11] : memref<16x256xf32, #tpu.memory_space<vmem>>, vector<16x256xf32>
      %c0_12 = arith.constant 0 : index
      %c0_13 = arith.constant 0 : index
      %13 = vector.load %arg5[%c0_12, %c0_13] : memref<1x256xf32, #tpu.memory_space<vmem>>, vector<1x256xf32>
      %14 = vector.broadcast %13 : vector<1x256xf32> to vector<16x256xf32>
      %15 = arith.addf %12, %14 : vector<16x256xf32>
      %c0_14 = arith.constant 0 : index
      %c0_15 = arith.constant 0 : index
      %16 = vector.load %arg6[%c0_14, %c0_15] : memref<16x256xf32, #tpu.memory_space<vmem>>, vector<16x256xf32>
      tpu.vector_store %arg6[%c0_14, %c0_15], %15 {strides = array<i32>} : memref<16x256xf32, #tpu.memory_space<vmem>>, vector<16x256xf32>,
    } else {
    }
    return
  }
  func.func @transform_0(%arg0: i32, %arg1: i32, %arg2: i32) -> (i32, i32) {
    %c0_i32 = arith.constant 0 : i32
    return %arg0, %arg2 : i32, i32
  }
  func.func @transform_1(%arg0: i32, %arg1: i32, %arg2: i32) -> (i32, i32) {
    %c0_i32 = arith.constant 0 : i32
    return %arg2, %arg1 : i32, i32
  }
  func.func @transform_2(%arg0: i32, %arg1: i32, %arg2: i32) -> (i32, i32) {
    %c0_i32 = arith.constant 0 : i32
    %c0_i32_0 = arith.constant 0 : i32
    return %c0_i32, %arg1 : i32, i32
  }
  func.func @transform_3(%arg0: i32, %arg1: i32, %arg2: i32) -> (i32, i32) {
    %c0_i32 = arith.constant 0 : i32
    return %arg0, %arg1 : i32, i32
  }
}

module attributes {stable_mosaic.version = 11 : i64} {
  func.func @_linear_kernel(%arg0: i32, %arg1: i32, %arg2: i32, %arg3: memref<16x256xf32, #tpu.memory_space<vmem>>, %arg4: memref<256x512xf32, #tpu.memory_space<vmem>>, %arg5: memref<1x512xf32, #tpu.memory_space<vmem>>, %arg6: memref<16x512xf32, #tpu.memory_space<vmem>>, %arg7: memref<16x512xf32, #tpu.memory_space<vmem>>) attributes {dimension_semantics = [#tpu.dimension_semantics<parallel>, #tpu.dimension_semantics<parallel>, #tpu.dimension_semantics<arbitrary>], iteration_bounds = array<i64: 1, 1, 1>, scalar_prefetch = 0 : i64, scratch_operands = 1 : i64, tpu.core_type = #tpu.core_type<tc>, window_params = [{transform_indices = @transform_0, window_bounds = array<i64: 16, 256>}, {transform_indices = @transform_1, window_bounds = array<i64: 256, 512>}, {transform_indices = @transform_2, window_bounds = array<i64: 1, 512>}, {transform_indices = @transform_3, window_bounds = array<i64: 16, 512>}]} {
    %c0_i32 = arith.constant 0 : i32
    %0 = arith.cmpi eq, %arg2, %c0_i32 : i32
    %1 = arith.extui %0 : i1 to i32
    %c0_i32_0 = arith.constant 0 : i32
    %2 = arith.cmpi ne, %1, %c0_i32_0 : i32
    scf.if %2 {
      %cst_10 = arith.constant 0.000000e+00 : f32
      %12 = vector.broadcast %cst_10 : f32 to vector<16x512xf32>
      %c0_11 = arith.constant 0 : index
      %c0_12 = arith.constant 0 : index
      %13 = vector.load %arg7[%c0_11, %c0_12] : memref<16x512xf32, #tpu.memory_space<vmem>>, vector<16x512xf32>
      tpu.vector_store %arg7[%c0_11, %c0_12], %12 {strides = array<i32>} : memref<16x512xf32, #tpu.memory_space<vmem>>, vector<16x512xf32>,
    } else {
    }
    %c0 = arith.constant 0 : index
    %c0_1 = arith.constant 0 : index
    %3 = vector.load %arg7[%c0, %c0_1] : memref<16x512xf32, #tpu.memory_space<vmem>>, vector<16x512xf32>
    %c0_2 = arith.constant 0 : index
    %c0_3 = arith.constant 0 : index
    %4 = vector.load %arg3[%c0_2, %c0_3] : memref<16x256xf32, #tpu.memory_space<vmem>>, vector<16x256xf32>
    %c0_4 = arith.constant 0 : index
    %c0_5 = arith.constant 0 : index
    %5 = vector.load %arg4[%c0_4, %c0_5] : memref<256x512xf32, #tpu.memory_space<vmem>>, vector<256x512xf32>
    %cst = arith.constant dense<0.000000e+00> : vector<16x512xf32>
    %6 = tpu.matmul %4, %5, %cst {dimension_numbers = #tpu.dot_dimension_numbers<[1], [0], [0], [1], [0, 0, 1, 1], [], []>} : vector<16x256xf32>, vector<256x512xf32>, vector<16x512xf32> -> vector<16x512xf32>
    %7 = arith.addf %3, %6 : vector<16x512xf32>
    %c0_6 = arith.constant 0 : index
    %c0_7 = arith.constant 0 : index
    %8 = vector.load %arg7[%c0_6, %c0_7] : memref<16x512xf32, #tpu.memory_space<vmem>>, vector<16x512xf32>
    tpu.vector_store %arg7[%c0_6, %c0_7], %7 {strides = array<i32>} : memref<16x512xf32, #tpu.memory_space<vmem>>, vector<16x512xf32>,
    %c0_i32_8 = arith.constant 0 : i32
    %9 = arith.cmpi eq, %arg2, %c0_i32_8 : i32
    %10 = arith.extui %9 : i1 to i32
    %c0_i32_9 = arith.constant 0 : i32
    %11 = arith.cmpi ne, %10, %c0_i32_9 : i32
    scf.if %11 {
      %c0_10 = arith.constant 0 : index
      %c0_11 = arith.constant 0 : index
      %12 = vector.load %arg7[%c0_10, %c0_11] : memref<16x512xf32, #tpu.memory_space<vmem>>, vector<16x512xf32>
      %c0_12 = arith.constant 0 : index
      %c0_13 = arith.constant 0 : index
      %13 = vector.load %arg5[%c0_12, %c0_13] : memref<1x512xf32, #tpu.memory_space<vmem>>, vector<1x512xf32>
      %14 = vector.broadcast %13 : vector<1x512xf32> to vector<16x512xf32>
      %15 = arith.addf %12, %14 : vector<16x512xf32>
      %c0_14 = arith.constant 0 : index
      %c0_15 = arith.constant 0 : index
      %16 = vector.load %arg6[%c0_14, %c0_15] : memref<16x512xf32, #tpu.memory_space<vmem>>, vector<16x512xf32>
      tpu.vector_store %arg6[%c0_14, %c0_15], %15 {strides = array<i32>} : memref<16x512xf32, #tpu.memory_space<vmem>>, vector<16x512xf32>,
    } else {
    }
    return
  }
  func.func @transform_0(%arg0: i32, %arg1: i32, %arg2: i32) -> (i32, i32) {
    %c0_i32 = arith.constant 0 : i32
    return %arg0, %arg2 : i32, i32
  }
  func.func @transform_1(%arg0: i32, %arg1: i32, %arg2: i32) -> (i32, i32) {
    %c0_i32 = arith.constant 0 : i32
    return %arg2, %arg1 : i32, i32
  }
  func.func @transform_2(%arg0: i32, %arg1: i32, %arg2: i32) -> (i32, i32) {
    %c0_i32 = arith.constant 0 : i32
    %c0_i32_0 = arith.constant 0 : i32
    return %c0_i32, %arg1 : i32, i32
  }
  func.func @transform_3(%arg0: i32, %arg1: i32, %arg2: i32) -> (i32, i32) {
    %c0_i32 = arith.constant 0 : i32
    return %arg0, %arg1 : i32, i32
  }
}

module attributes {stable_mosaic.version = 11 : i64} {
  func.func @_attention_kernel(%arg0: i32, %arg1: i32, %arg2: i32, %arg3: i32, %arg4: memref<1x8x128xf32, #tpu.memory_space<vmem>>, %arg5: memref<1x8x128xf32, #tpu.memory_space<vmem>>, %arg6: memref<1x8x128xf32, #tpu.memory_space<vmem>>, %arg7: memref<1x1x8x8xi8, #tpu.memory_space<vmem>>, %arg8: memref<1x8x128xf32, #tpu.memory_space<vmem>>, %arg9: memref<8x1xf32, #tpu.memory_space<vmem>>, %arg10: memref<8x1xf32, #tpu.memory_space<vmem>>, %arg11: memref<8x128xf32, #tpu.memory_space<vmem>>) attributes {dimension_semantics = [#tpu.dimension_semantics<parallel>, #tpu.dimension_semantics<parallel>, #tpu.dimension_semantics<parallel>, #tpu.dimension_semantics<arbitrary>], iteration_bounds = array<i64: 2, 2, 1, 1>, scalar_prefetch = 0 : i64, scratch_operands = 3 : i64, tpu.core_type = #tpu.core_type<tc>, window_params = [{transform_indices = @transform_0, window_bounds = array<i64: 1, 8, 128>}, {transform_indices = @transform_1, window_bounds = array<i64: 1, 8, 128>}, {transform_indices = @transform_2, window_bounds = array<i64: 1, 8, 128>}, {transform_indices = @transform_3, window_bounds = array<i64: 1, 1, 8, 8>}, {transform_indices = @transform_4, window_bounds = array<i64: 1, 8, 128>}]} {
    %c0_i32 = arith.constant 0 : i32
    %0 = arith.cmpi eq, %arg3, %c0_i32 : i32
    %1 = arith.extui %0 : i1 to i32
    %c0_i32_0 = arith.constant 0 : i32
    %2 = arith.cmpi ne, %1, %c0_i32_0 : i32
    scf.if %2 {
      %cst_31 = arith.constant 0xFF800000 : f32
      %41 = vector.broadcast %cst_31 : f32 to vector<8x1xf32>
      %c0_32 = arith.constant 0 : index
      %c0_33 = arith.constant 0 : index
      %42 = vector.load %arg9[%c0_32, %c0_33] : memref<8x1xf32, #tpu.memory_space<vmem>>, vector<8x1xf32>
      tpu.vector_store %arg9[%c0_32, %c0_33], %41 {strides = array<i32>} : memref<8x1xf32, #tpu.memory_space<vmem>>, vector<8x1xf32>,
      %cst_34 = arith.constant 0.000000e+00 : f32
      %43 = vector.broadcast %cst_34 : f32 to vector<8x1xf32>
      %c0_35 = arith.constant 0 : index
      %c0_36 = arith.constant 0 : index
      %44 = vector.load %arg10[%c0_35, %c0_36] : memref<8x1xf32, #tpu.memory_space<vmem>>, vector<8x1xf32>
      tpu.vector_store %arg10[%c0_35, %c0_36], %43 {strides = array<i32>} : memref<8x1xf32, #tpu.memory_space<vmem>>, vector<8x1xf32>,
      %cst_37 = arith.constant 0.000000e+00 : f32
      %45 = vector.broadcast %cst_37 : f32 to vector<8x128xf32>
      %c0_38 = arith.constant 0 : index
      %c0_39 = arith.constant 0 : index
      %46 = vector.load %arg11[%c0_38, %c0_39] : memref<8x128xf32, #tpu.memory_space<vmem>>, vector<8x128xf32>
      tpu.vector_store %arg11[%c0_38, %c0_39], %45 {strides = array<i32>} : memref<8x128xf32, #tpu.memory_space<vmem>>, vector<8x128xf32>,
    } else {
    }
    %c0 = arith.constant 0 : index
    %c0_1 = arith.constant 0 : index
    %c0_2 = arith.constant 0 : index
    %3 = vector.load %arg4[%c0, %c0_1, %c0_2] : memref<1x8x128xf32, #tpu.memory_space<vmem>>, vector<1x8x128xf32>
    %4 = vector.shape_cast %3 : vector<1x8x128xf32> to vector<8x128xf32>
    %c0_3 = arith.constant 0 : index
    %c0_4 = arith.constant 0 : index
    %c0_5 = arith.constant 0 : index
    %5 = vector.load %arg5[%c0_3, %c0_4, %c0_5] : memref<1x8x128xf32, #tpu.memory_space<vmem>>, vector<1x8x128xf32>
    %6 = vector.shape_cast %5 : vector<1x8x128xf32> to vector<8x128xf32>
    %c0_6 = arith.constant 0 : index
    %c0_7 = arith.constant 0 : index
    %c0_8 = arith.constant 0 : index
    %7 = vector.load %arg6[%c0_6, %c0_7, %c0_8] : memref<1x8x128xf32, #tpu.memory_space<vmem>>, vector<1x8x128xf32>
    %8 = vector.shape_cast %7 : vector<1x8x128xf32> to vector<8x128xf32>
    %c0_9 = arith.constant 0 : index
    %c0_10 = arith.constant 0 : index
    %c0_11 = arith.constant 0 : index
    %c0_12 = arith.constant 0 : index
    %9 = vector.load %arg7[%c0_9, %c0_10, %c0_11, %c0_12] : memref<1x1x8x8xi8, #tpu.memory_space<vmem>>, vector<1x1x8x8xi8>
    %10 = vector.shape_cast %9 : vector<1x1x8x8xi8> to vector<8x8xi8>
    %cst = arith.constant dense<0.000000e+00> : vector<8x8xf32>
    %11 = tpu.matmul %4, %6, %cst {dimension_numbers = #tpu.dot_dimension_numbers<[1], [1], [0], [0], [0, 0, 1, 0], [], []>} : vector<8x128xf32>, vector<8x128xf32>, vector<8x8xf32> -> vector<8x8xf32>
    %c0_i8 = arith.constant 0 : i8
    %12 = vector.broadcast %c0_i8 : i8 to vector<8x8xi8>
    %13 = arith.cmpi ne, %10, %12 : vector<8x8xi8>
    %cst_13 = arith.constant -1.000000e+04 : f32
    %14 = vector.broadcast %cst_13 : f32 to vector<8x8xf32>
    %15 = arith.select %13, %11, %14 : vector<8x8xi1>, vector<8x8xf32>
    %c0_14 = arith.constant 0 : index
    %c0_15 = arith.constant 0 : index
    %16 = vector.load %arg9[%c0_14, %c0_15] : memref<8x1xf32, #tpu.memory_space<vmem>>, vector<8x1xf32>
    %cst_16 = arith.constant dense<0xFF800000> : vector<8xf32>
    %17 = vector.multi_reduction <maximumf>, %15, %cst_16 [1] : vector<8x8xf32> to vector<8xf32>
    %18 = vector.shape_cast %17 : vector<8xf32> to vector<8x1xf32>
    %19 = arith.maximumf %16, %18 : vector<8x1xf32>
    %20 = arith.subf %16, %19 : vector<8x1xf32>
    %21 = math.exp %20 : vector<8x1xf32>
    %22 = vector.broadcast %19 : vector<8x1xf32> to vector<8x8xf32>
    %23 = arith.subf %15, %22 : vector<8x8xf32>
    %24 = math.exp %23 : vector<8x8xf32>
    %c0_17 = arith.constant 0 : index
    %c0_18 = arith.constant 0 : index
    %25 = vector.load %arg10[%c0_17, %c0_18] : memref<8x1xf32, #tpu.memory_space<vmem>>, vector<8x1xf32>
    %26 = arith.mulf %21, %25 : vector<8x1xf32>
    %cst_19 = arith.constant dense<0.000000e+00> : vector<8xf32>
    %27 = vector.multi_reduction <add>, %24, %cst_19 [1] : vector<8x8xf32> to vector<8xf32>
    %28 = vector.shape_cast %27 : vector<8xf32> to vector<8x1xf32>
    %29 = arith.addf %26, %28 : vector<8x1xf32>
    %c0_20 = arith.constant 0 : index
    %c0_21 = arith.constant 0 : index
    %30 = vector.load %arg10[%c0_20, %c0_21] : memref<8x1xf32, #tpu.memory_space<vmem>>, vector<8x1xf32>
    tpu.vector_store %arg10[%c0_20, %c0_21], %29 {strides = array<i32>} : memref<8x1xf32, #tpu.memory_space<vmem>>, vector<8x1xf32>,
    %c0_22 = arith.constant 0 : index
    %c0_23 = arith.constant 0 : index
    %31 = vector.load %arg11[%c0_22, %c0_23] : memref<8x128xf32, #tpu.memory_space<vmem>>, vector<8x128xf32>
    %32 = vector.broadcast %21 : vector<8x1xf32> to vector<8x128xf32>
    %33 = arith.mulf %32, %31 : vector<8x128xf32>
    %cst_24 = arith.constant dense<0.000000e+00> : vector<8x128xf32>
    %34 = tpu.matmul %24, %8, %cst_24 {dimension_numbers = #tpu.dot_dimension_numbers<[1], [0], [0], [1], [0, 0, 1, 1], [], []>} : vector<8x8xf32>, vector<8x128xf32>, vector<8x128xf32> -> vector<8x128xf32>
    %35 = arith.addf %33, %34 : vector<8x128xf32>
    %c0_25 = arith.constant 0 : index
    %c0_26 = arith.constant 0 : index
    %36 = vector.load %arg11[%c0_25, %c0_26] : memref<8x128xf32, #tpu.memory_space<vmem>>, vector<8x128xf32>
    tpu.vector_store %arg11[%c0_25, %c0_26], %35 {strides = array<i32>} : memref<8x128xf32, #tpu.memory_space<vmem>>, vector<8x128xf32>,
    %c0_27 = arith.constant 0 : index
    %c0_28 = arith.constant 0 : index
    %37 = vector.load %arg9[%c0_27, %c0_28] : memref<8x1xf32, #tpu.memory_space<vmem>>, vector<8x1xf32>
    tpu.vector_store %arg9[%c0_27, %c0_28], %19 {strides = array<i32>} : memref<8x1xf32, #tpu.memory_space<vmem>>, vector<8x1xf32>,
    %c0_i32_29 = arith.constant 0 : i32
    %38 = arith.cmpi eq, %arg3, %c0_i32_29 : i32
    %39 = arith.extui %38 : i1 to i32
    %c0_i32_30 = arith.constant 0 : i32
    %40 = arith.cmpi ne, %39, %c0_i32_30 : i32
    scf.if %40 {
      %c0_31 = arith.constant 0 : index
      %c0_32 = arith.constant 0 : index
      %41 = vector.load %arg10[%c0_31, %c0_32] : memref<8x1xf32, #tpu.memory_space<vmem>>, vector<8x1xf32>
      %42 = tpu.reciprocal %41 {approx = true} : vector<8x1xf32> -> vector<8x1xf32>
      %c0_33 = arith.constant 0 : index
      %c0_34 = arith.constant 0 : index
      %43 = vector.load %arg11[%c0_33, %c0_34] : memref<8x128xf32, #tpu.memory_space<vmem>>, vector<8x128xf32>
      %44 = vector.broadcast %42 : vector<8x1xf32> to vector<8x128xf32>
      %45 = arith.mulf %43, %44 : vector<8x128xf32>
      %c0_35 = arith.constant 0 : index
      %c0_36 = arith.constant 0 : index
      %c0_37 = arith.constant 0 : index
      %46 = vector.load %arg8[%c0_35, %c0_36, %c0_37] : memref<1x8x128xf32, #tpu.memory_space<vmem>>, vector<1x8x128xf32>
      %47 = vector.shape_cast %46 : vector<1x8x128xf32> to vector<8x128xf32>
      %48 = vector.shape_cast %45 : vector<8x128xf32> to vector<1x8x128xf32>
      tpu.vector_store %arg8[%c0_35, %c0_36, %c0_37], %48 {strides = array<i32>} : memref<1x8x128xf32, #tpu.memory_space<vmem>>, vector<1x8x128xf32>,
    } else {
    }
    return
  }
  func.func @transform_0(%arg0: i32, %arg1: i32, %arg2: i32, %arg3: i32) -> (i32, i32, i32) {
    %c0_i32 = arith.constant 0 : i32
    return %arg0, %arg2, %arg1 : i32, i32, i32
  }
  func.func @transform_1(%arg0: i32, %arg1: i32, %arg2: i32, %arg3: i32) -> (i32, i32, i32) {
    %c0_i32 = arith.constant 0 : i32
    return %arg0, %arg3, %arg1 : i32, i32, i32
  }
  func.func @transform_2(%arg0: i32, %arg1: i32, %arg2: i32, %arg3: i32) -> (i32, i32, i32) {
    %c2_i32 = arith.constant 2 : i32
    %0 = arith.addi %c2_i32, %arg1 : i32
    %c0_i32 = arith.constant 0 : i32
    return %arg0, %arg3, %0 : i32, i32, i32
  }
  func.func @transform_3(%arg0: i32, %arg1: i32, %arg2: i32, %arg3: i32) -> (i32, i32, i32, i32) {
    %c0_i32 = arith.constant 0 : i32
    %c0_i32_0 = arith.constant 0 : i32
    return %arg0, %c0_i32, %arg2, %arg3 : i32, i32, i32, i32
  }
  func.func @transform_4(%arg0: i32, %arg1: i32, %arg2: i32, %arg3: i32) -> (i32, i32, i32) {
    %c0_i32 = arith.constant 0 : i32
    return %arg0, %arg2, %arg1 : i32, i32, i32
  }
}

module attributes {stable_mosaic.version = 11 : i64} {
  func.func @_linear_kernel(%arg0: i32, %arg1: i32, %arg2: i32, %arg3: memref<16x256xf32, #tpu.memory_space<vmem>>, %arg4: memref<256x256xf32, #tpu.memory_space<vmem>>, %arg5: memref<1x256xf32, #tpu.memory_space<vmem>>, %arg6: memref<16x256xf32, #tpu.memory_space<vmem>>, %arg7: memref<16x256xf32, #tpu.memory_space<vmem>>) attributes {dimension_semantics = [#tpu.dimension_semantics<parallel>, #tpu.dimension_semantics<parallel>, #tpu.dimension_semantics<arbitrary>], iteration_bounds = array<i64: 1, 1, 1>, scalar_prefetch = 0 : i64, scratch_operands = 1 : i64, tpu.core_type = #tpu.core_type<tc>, window_params = [{transform_indices = @transform_0, window_bounds = array<i64: 16, 256>}, {transform_indices = @transform_1, window_bounds = array<i64: 256, 256>}, {transform_indices = @transform_2, window_bounds = array<i64: 1, 256>}, {transform_indices = @transform_3, window_bounds = array<i64: 16, 256>}]} {
    %c0_i32 = arith.constant 0 : i32
    %0 = arith.cmpi eq, %arg2, %c0_i32 : i32
    %1 = arith.extui %0 : i1 to i32
    %c0_i32_0 = arith.constant 0 : i32
    %2 = arith.cmpi ne, %1, %c0_i32_0 : i32
    scf.if %2 {
      %cst_10 = arith.constant 0.000000e+00 : f32
      %12 = vector.broadcast %cst_10 : f32 to vector<16x256xf32>
      %c0_11 = arith.constant 0 : index
      %c0_12 = arith.constant 0 : index
      %13 = vector.load %arg7[%c0_11, %c0_12] : memref<16x256xf32, #tpu.memory_space<vmem>>, vector<16x256xf32>
      tpu.vector_store %arg7[%c0_11, %c0_12], %12 {strides = array<i32>} : memref<16x256xf32, #tpu.memory_space<vmem>>, vector<16x256xf32>,
    } else {
    }
    %c0 = arith.constant 0 : index
    %c0_1 = arith.constant 0 : index
    %3 = vector.load %arg7[%c0, %c0_1] : memref<16x256xf32, #tpu.memory_space<vmem>>, vector<16x256xf32>
    %c0_2 = arith.constant 0 : index
    %c0_3 = arith.constant 0 : index
    %4 = vector.load %arg3[%c0_2, %c0_3] : memref<16x256xf32, #tpu.memory_space<vmem>>, vector<16x256xf32>
    %c0_4 = arith.constant 0 : index
    %c0_5 = arith.constant 0 : index
    %5 = vector.load %arg4[%c0_4, %c0_5] : memref<256x256xf32, #tpu.memory_space<vmem>>, vector<256x256xf32>
    %cst = arith.constant dense<0.000000e+00> : vector<16x256xf32>
    %6 = tpu.matmul %4, %5, %cst {dimension_numbers = #tpu.dot_dimension_numbers<[1], [0], [0], [1], [0, 0, 1, 1], [], []>} : vector<16x256xf32>, vector<256x256xf32>, vector<16x256xf32> -> vector<16x256xf32>
    %7 = arith.addf %3, %6 : vector<16x256xf32>
    %c0_6 = arith.constant 0 : index
    %c0_7 = arith.constant 0 : index
    %8 = vector.load %arg7[%c0_6, %c0_7] : memref<16x256xf32, #tpu.memory_space<vmem>>, vector<16x256xf32>
    tpu.vector_store %arg7[%c0_6, %c0_7], %7 {strides = array<i32>} : memref<16x256xf32, #tpu.memory_space<vmem>>, vector<16x256xf32>,
    %c0_i32_8 = arith.constant 0 : i32
    %9 = arith.cmpi eq, %arg2, %c0_i32_8 : i32
    %10 = arith.extui %9 : i1 to i32
    %c0_i32_9 = arith.constant 0 : i32
    %11 = arith.cmpi ne, %10, %c0_i32_9 : i32
    scf.if %11 {
      %c0_10 = arith.constant 0 : index
      %c0_11 = arith.constant 0 : index
      %12 = vector.load %arg7[%c0_10, %c0_11] : memref<16x256xf32, #tpu.memory_space<vmem>>, vector<16x256xf32>
      %c0_12 = arith.constant 0 : index
      %c0_13 = arith.constant 0 : index
      %13 = vector.load %arg5[%c0_12, %c0_13] : memref<1x256xf32, #tpu.memory_space<vmem>>, vector<1x256xf32>
      %14 = vector.broadcast %13 : vector<1x256xf32> to vector<16x256xf32>
      %15 = arith.addf %12, %14 : vector<16x256xf32>
      %c0_14 = arith.constant 0 : index
      %c0_15 = arith.constant 0 : index
      %16 = vector.load %arg6[%c0_14, %c0_15] : memref<16x256xf32, #tpu.memory_space<vmem>>, vector<16x256xf32>
      tpu.vector_store %arg6[%c0_14, %c0_15], %15 {strides = array<i32>} : memref<16x256xf32, #tpu.memory_space<vmem>>, vector<16x256xf32>,
    } else {
    }
    return
  }
  func.func @transform_0(%arg0: i32, %arg1: i32, %arg2: i32) -> (i32, i32) {
    %c0_i32 = arith.constant 0 : i32
    return %arg0, %arg2 : i32, i32
  }
  func.func @transform_1(%arg0: i32, %arg1: i32, %arg2: i32) -> (i32, i32) {
    %c0_i32 = arith.constant 0 : i32
    return %arg2, %arg1 : i32, i32
  }
  func.func @transform_2(%arg0: i32, %arg1: i32, %arg2: i32) -> (i32, i32) {
    %c0_i32 = arith.constant 0 : i32
    %c0_i32_0 = arith.constant 0 : i32
    return %c0_i32, %arg1 : i32, i32
  }
  func.func @transform_3(%arg0: i32, %arg1: i32, %arg2: i32) -> (i32, i32) {
    %c0_i32 = arith.constant 0 : i32
    return %arg0, %arg1 : i32, i32
  }
}

</mosaic_0001>

<llo_original>
// kernel: cross_attention_forward.4
$region0: #{cross_attention_forward.4}
  #allocation0 [shape = 'u32[]', space=smem, size = 0x4, offset = 0x4, fixed_abs, tag = 'smem constant byte address 0x4 - core index']
  #allocation1 [shape = 'u32[144,128]{1,0:T(1,128)}', space=vmem, size = 0x12000, scoped, tag = 'internal scratch']
  #allocation2 [shape = 'f32[16,256]{1,0:T(8,128)}', space=vmem, size = 0x4000, scoped, tag = 'scratch operand']
  %s0 = inlined_call_operand.vmem [shape: f32[16,256], index: 0, kind: input, shape index: {}]
  %s1 = inlined_call_operand.vmem [shape: f32[256,256], index: 1, kind: input, shape index: {}]
  %s2 = inlined_call_operand.vmem [shape: f32[1,256], index: 2, kind: input, shape index: {}]
  %s3 = inlined_call_operand.vmem [shape: f32[16,256], index: 3, kind: output, shape index: {}]
  %s4 = sld [smem:[#allocation0]]
  $region30: #{cross_attention_forward.4} parent=0
    _
  %s6 = ssub.s32 1, %s4
  %s7 = scalar_select 0, %s6, %s4
  // Predicated region
  $region2: #{cross_attention_forward.4} parent=0 // pred_check
    _
  $region3: #{cross_attention_forward.4} parent=0 // pred_check_branch
    %9 = sbr.rel (0) target = $region5
  $region4: #{cross_attention_forward.4} parent=0 // pred_region
    _
  $region5: #{cross_attention_forward.4} parent=0 // pred_fallthru
    _
  // Predicated region
  $region6: #{cross_attention_forward.4} parent=0 // pred_check
    _
  $region7: #{cross_attention_forward.4} parent=0 // pred_check_branch
    %11 = sbr.rel (0) target = $region9
  $region8: #{cross_attention_forward.4} parent=0 // pred_region
    _
  $region9: #{cross_attention_forward.4} parent=0 // pred_fallthru
    _
  // Predicated region
  $region10: #{cross_attention_forward.4} parent=0 // pred_check
    _
  $region11: #{cross_attention_forward.4} parent=0 // pred_check_branch
    %13 = sbr.rel (0) target = $region13
  $region12: #{cross_attention_forward.4} parent=0 // pred_region
    _
  $region13: #{cross_attention_forward.4} parent=0 // pred_fallthru
    _
  %p14 = scmp.eq.s32.totalorder 0, 0
  // Predicated region
  $region14: #{cross_attention_forward.4} parent=0 // pred_check
    %p15 = pneg %p14
  $region15: #{cross_attention_forward.4} parent=0 // pred_check_branch
    %17 = sbr.rel (%p15) target = $region17
  $region16: #{cross_attention_forward.4} parent=0 // pred_region
    %18 = vst [vmem:[#allocation2] sm:$0xff] 0.0
    %19 = vst [vmem:[#allocation2 + $0x8] sm:$0xff] 0.0
    %20 = vst [vmem:[#allocation2 + $0x10] sm:$0xff] 0.0
    %21 = vst [vmem:[#allocation2 + $0x18] sm:$0xff] 0.0
  $region17: #{cross_attention_forward.4} parent=0 // pred_fallthru
    _
  %v22 = vld [vmem:[#allocation2] sm:$0xff]
  %v23 = vld [vmem:[#allocation2 + $0x8] sm:$0xff]
  %v24 = vld [vmem:[#allocation2 + $0x10] sm:$0xff]
  %v25 = vld [vmem:[#allocation2 + $0x18] sm:$0xff]
  %v26 = vld [vmem:[%s0] sm:$0xff]
  %v27 = vld [vmem:[%s0 + $0x8] sm:$0xff]
  %v28 = vld [vmem:[%s0 + $0x10] sm:$0xff]
  %v29 = vld [vmem:[%s0 + $0x18] sm:$0xff]
  %v30 = vld [vmem:[%s1] sm:$0xff]
  %v31 = vld [vmem:[%s1 + $0x8] sm:$0xff]
  %v32 = vld [vmem:[%s1 + $0x10] sm:$0xff]
  %v33 = vld [vmem:[%s1 + $0x18] sm:$0xff]
  %v34 = vld [vmem:[%s1 + $0x20] sm:$0xff]
  %v35 = vld [vmem:[%s1 + $0x28] sm:$0xff]
  %v36 = vld [vmem:[%s1 + $0x30] sm:$0xff]
  %v37 = vld [vmem:[%s1 + $0x38] sm:$0xff]
  %v38 = vld [vmem:[%s1 + $0x40] sm:$0xff]
  %v39 = vld [vmem:[%s1 + $0x48] sm:$0xff]
  %v40 = vld [vmem:[%s1 + $0x50] sm:$0xff]
  %v41 = vld [vmem:[%s1 + $0x58] sm:$0xff]
  %v42 = vld [vmem:[%s1 + $0x60] sm:$0xff]
  %v43 = vld [vmem:[%s1 + $0x68] sm:$0xff]
  %v44 = vld [vmem:[%s1 + $0x70] sm:$0xff]
  %v45 = vld [vmem:[%s1 + $0x78] sm:$0xff]
  %v46 = vld [vmem:[%s1 + $0x80] sm:$0xff]
  %v47 = vld [vmem:[%s1 + $0x88] sm:$0xff]
  %v48 = vld [vmem:[%s1 + $0x90] sm:$0xff]
  %v49 = vld [vmem:[%s1 + $0x98] sm:$0xff]
  %v50 = vld [vmem:[%s1 + $0xa0] sm:$0xff]
  %v51 = vld [vmem:[%s1 + $0xa8] sm:$0xff]
  %v52 = vld [vmem:[%s1 + $0xb0] sm:$0xff]
  %v53 = vld [vmem:[%s1 + $0xb8] sm:$0xff]
  %v54 = vld [vmem:[%s1 + $0xc0] sm:$0xff]
  %v55 = vld [vmem:[%s1 + $0xc8] sm:$0xff]
  %v56 = vld [vmem:[%s1 + $0xd0] sm:$0xff]
  %v57 = vld [vmem:[%s1 + $0xd8] sm:$0xff]
  %v58 = vld [vmem:[%s1 + $0xe0] sm:$0xff]
  %v59 = vld [vmem:[%s1 + $0xe8] sm:$0xff]
  %v60 = vld [vmem:[%s1 + $0xf0] sm:$0xff]
  %v61 = vld [vmem:[%s1 + $0xf8] sm:$0xff]
  %v62 = vld [vmem:[%s1 + $0x100] sm:$0xff]
  %v63 = vld [vmem:[%s1 + $0x108] sm:$0xff]
  %v64 = vld [vmem:[%s1 + $0x110] sm:$0xff]
  %v65 = vld [vmem:[%s1 + $0x118] sm:$0xff]
  %v66 = vld [vmem:[%s1 + $0x120] sm:$0xff]
  %v67 = vld [vmem:[%s1 + $0x128] sm:$0xff]
  %v68 = vld [vmem:[%s1 + $0x130] sm:$0xff]
  %v69 = vld [vmem:[%s1 + $0x138] sm:$0xff]
  %v70 = vld [vmem:[%s1 + $0x140] sm:$0xff]
  %v71 = vld [vmem:[%s1 + $0x148] sm:$0xff]
  %v72 = vld [vmem:[%s1 + $0x150] sm:$0xff]
  %v73 = vld [vmem:[%s1 + $0x158] sm:$0xff]
  %v74 = vld [vmem:[%s1 + $0x160] sm:$0xff]
  %v75 = vld [vmem:[%s1 + $0x168] sm:$0xff]
  %v76 = vld [vmem:[%s1 + $0x170] sm:$0xff]
  %v77 = vld [vmem:[%s1 + $0x178] sm:$0xff]
  %v78 = vld [vmem:[%s1 + $0x180] sm:$0xff]
  %v79 = vld [vmem:[%s1 + $0x188] sm:$0xff]
  %v80 = vld [vmem:[%s1 + $0x190] sm:$0xff]
  %v81 = vld [vmem:[%s1 + $0x198] sm:$0xff]
  %v82 = vld [vmem:[%s1 + $0x1a0] sm:$0xff]
  %v83 = vld [vmem:[%s1 + $0x1a8] sm:$0xff]
  %v84 = vld [vmem:[%s1 + $0x1b0] sm:$0xff]
  %v85 = vld [vmem:[%s1 + $0x1b8] sm:$0xff]
  %v86 = vld [vmem:[%s1 + $0x1c0] sm:$0xff]
  %v87 = vld [vmem:[%s1 + $0x1c8] sm:$0xff]
  %v88 = vld [vmem:[%s1 + $0x1d0] sm:$0xff]
  %v89 = vld [vmem:[%s1 + $0x1d8] sm:$0xff]
  %v90 = vld [vmem:[%s1 + $0x1e0] sm:$0xff]
  %v91 = vld [vmem:[%s1 + $0x1e8] sm:$0xff]
  %v92 = vld [vmem:[%s1 + $0x1f0] sm:$0xff]
  %v93 = vld [vmem:[%s1 + $0x1f8] sm:$0xff]
  %94 = vmatprep.subr.mxu0 %v61
  %95 = vmatpush1.msra.mxu0 %v60
  %96 = vmatprep.subr.mxu0 %v59
  %97 = vmatpush1.msra.mxu0 %v58
  %98 = vmatprep.subr.mxu0 %v57
  %99 = vmatpush1.msra.mxu0 %v56
  %100 = vmatprep.subr.mxu0 %v55
  %101 = vmatpush1.msra.mxu0 %v54
  %102 = vmatprep.subr.mxu0 %v53
  %103 = vmatpush1.msra.mxu0 %v52
  %104 = vmatprep.subr.mxu0 %v51
  %105 = vmatpush1.msra.mxu0 %v50
  %106 = vmatprep.subr.mxu0 %v49
  %107 = vmatpush1.msra.mxu0 %v48
  %108 = vmatprep.subr.mxu0 %v47
  %109 = vmatpush1.msra.mxu0 %v46
  %110 = vmatprep.subr.mxu0 %v45
  %111 = vmatpush1.msra.mxu0 %v44
  %112 = vmatprep.subr.mxu0 %v43
  %113 = vmatpush1.msra.mxu0 %v42
  %114 = vmatprep.subr.mxu0 %v41
  %115 = vmatpush1.msra.mxu0 %v40
  %116 = vmatprep.subr.mxu0 %v39
  %117 = vmatpush1.msra.mxu0 %v38
  %118 = vmatprep.subr.mxu0 %v37
  %119 = vmatpush1.msra.mxu0 %v36
  %120 = vmatprep.subr.mxu0 %v35
  %121 = vmatpush1.msra.mxu0 %v34
  %122 = vmatprep.subr.mxu0 %v33
  %123 = vmatpush1.msra.mxu0 %v32
  %124 = vmatprep.subr.mxu0 %v31
  %125 = vmatpush1.msra.mxu0 %v30
  %126 = vmatprep.subr.mxu0 %v93
  %127 = vmatpush2.msra.mxu0 %v92
  %128 = vmatprep.subr.mxu0 %v91
  %129 = vmatpush2.msra.mxu0 %v90
  %130 = vmatprep.subr.mxu0 %v89
  %131 = vmatpush2.msra.mxu0 %v88
  %132 = vmatprep.subr.mxu0 %v87
  %133 = vmatpush2.msra.mxu0 %v86
  %134 = vmatprep.subr.mxu0 %v85
  %135 = vmatpush2.msra.mxu0 %v84
  %136 = vmatprep.subr.mxu0 %v83
  %137 = vmatpush2.msra.mxu0 %v82
  %138 = vmatprep.subr.mxu0 %v81
  %139 = vmatpush2.msra.mxu0 %v80
  %140 = vmatprep.subr.mxu0 %v79
  %141 = vmatpush2.msra.mxu0 %v78
  %142 = vmatprep.subr.mxu0 %v77
  %143 = vmatpush2.msra.mxu0 %v76
  %144 = vmatprep.subr.mxu0 %v75
  %145 = vmatpush2.msra.mxu0 %v74
  %146 = vmatprep.subr.mxu0 %v73
  %147 = vmatpush2.msra.mxu0 %v72
  %148 = vmatprep.subr.mxu0 %v71
  %149 = vmatpush2.msra.mxu0 %v70
  %150 = vmatprep.subr.mxu0 %v69
  %151 = vmatpush2.msra.mxu0 %v68
  %152 = vmatprep.subr.mxu0 %v67
  %153 = vmatpush2.msra.mxu0 %v66
  %154 = vmatprep.subr.mxu0 %v65
  %155 = vmatpush2.msra.mxu0 %v64
  %156 = vmatprep.subr.mxu0 %v63
  %157 = vmatpush2.msra.mxu0 %v62
  %158 = vmatprep.mubr.f32.mxu0 %v27
  %159 = vmatmul.mubr.f32.gmra.mxu0 %v26
  %v160 = vpop.f32.mrf.mxu0
  %v161 = vadd.f32 0.0, %v160
  %v162 = vpop.f32.mrf.mxu0
  %v163 = vadd.f32 0.0, %v162
  %164 = vmatprep.mubr.f32.mxu0 %v29
  %165 = vmatmul.mubr.f32.gmra.mxu0 %v28
  %v166 = vpop.f32.mrf.mxu0
  %v167 = vadd.f32 0.0, %v166
  %v168 = vpop.f32.mrf.mxu0
  %v169 = vadd.f32 0.0, %v168
  %170 = vdwg.mxu0
  %v171 = vadd.f32 %v22, %v161
  %v172 = vadd.f32 %v23, %v163
  %v173 = vadd.f32 %v24, %v167
  %v174 = vadd.f32 %v25, %v169
  %175 = vst [vmem:[#allocation2] sm:$0xff] %v171
  %176 = vst [vmem:[#allocation2 + $0x8] sm:$0xff] %v172
  %177 = vst [vmem:[#allocation2 + $0x10] sm:$0xff] %v173
  %178 = vst [vmem:[#allocation2 + $0x18] sm:$0xff] %v174
  // Predicated region
  $region18: #{cross_attention_forward.4} parent=0 // pred_check
    %p179 = pneg %p14
  $region19: #{cross_attention_forward.4} parent=0 // pred_check_branch
    %181 = sbr.rel (%p179) target = $region21
  $region20: #{cross_attention_forward.4} parent=0 // pred_region
    %v182 = vld [vmem:[#allocation2] sm:$0xff]
    %v183 = vld [vmem:[#allocation2 + $0x8] sm:$0xff]
    %v184 = vld [vmem:[#allocation2 + $0x10] sm:$0xff]
    %v185 = vld [vmem:[#allocation2 + $0x18] sm:$0xff]
    %v186 = vld [vmem:[%s2] sm:$0x3]
    %v188 = vlaneseq
    %v189 = vshrl.u32 %v188, 7
    %v190 = vsub.s32 0, %v189
    %v191 = vrot.slane %v186, %v190
    %v192 = vlaneseq
    %v193 = vshrl.u32 %v192, 7
    %v194 = vsub.s32 1, %v193
    %v195 = vrot.slane %v186, %v194
    %v198 = vadd.f32 %v182, %v191
    %v199 = vadd.f32 %v183, %v195
    %v200 = vadd.f32 %v184, %v191
    %v201 = vadd.f32 %v185, %v195
    %202 = vst [vmem:[%s3] sm:$0xff] %v198
    %203 = vst [vmem:[%s3 + $0x8] sm:$0xff] %v199
    %204 = vst [vmem:[%s3 + $0x10] sm:$0xff] %v200
    %205 = vst [vmem:[%s3 + $0x18] sm:$0xff] %v201
  $region21: #{cross_attention_forward.4} parent=0 // pred_fallthru
    _
  // Predicated region
  $region22: #{cross_attention_forward.4} parent=0 // pred_check
    _
  $region23: #{cross_attention_forward.4} parent=0 // pred_check_branch
    %207 = sbr.rel (0) target = $region25
  $region24: #{cross_attention_forward.4} parent=0 // pred_region
    _
  $region25: #{cross_attention_forward.4} parent=0 // pred_fallthru
    _
  // Predicated region
  $region26: #{cross_attention_forward.4} parent=0 // pred_check
    _
  $region27: #{cross_attention_forward.4} parent=0 // pred_check_branch
    %209 = sbr.rel (0) target = $region29
  $region28: #{cross_attention_forward.4} parent=0 // pred_region
    _
  $region29: #{cross_attention_forward.4} parent=0 // pred_fallthru
    _

// kernel: cross_attention_forward.5
$region0: #{cross_attention_forward.5}
  #allocation0 [shape = 'u32[]', space=smem, size = 0x4, offset = 0x4, fixed_abs, tag = 'smem constant byte address 0x4 - core index']
  #allocation1 [shape = 'u32[144,128]{1,0:T(1,128)}', space=vmem, size = 0x12000, scoped, tag = 'internal scratch']
  #allocation2 [shape = 'f32[16,512]{1,0:T(8,128)}', space=vmem, size = 0x8000, scoped, tag = 'scratch operand']
  %s0 = inlined_call_operand.vmem [shape: f32[16,256], index: 0, kind: input, shape index: {}]
  %s1 = inlined_call_operand.vmem [shape: f32[256,512], index: 1, kind: input, shape index: {}]
  %s2 = inlined_call_operand.vmem [shape: f32[1,512], index: 2, kind: input, shape index: {}]
  %s3 = inlined_call_operand.vmem [shape: f32[16,512], index: 3, kind: output, shape index: {}]
  %s4 = sld [smem:[#allocation0]]
  $region30: #{cross_attention_forward.5} parent=0
    _
  %s6 = ssub.s32 1, %s4
  %s7 = scalar_select 0, %s6, %s4
  // Predicated region
  $region2: #{cross_attention_forward.5} parent=0 // pred_check
    _
  $region3: #{cross_attention_forward.5} parent=0 // pred_check_branch
    %9 = sbr.rel (0) target = $region5
  $region4: #{cross_attention_forward.5} parent=0 // pred_region
    _
  $region5: #{cross_attention_forward.5} parent=0 // pred_fallthru
    _
  // Predicated region
  $region6: #{cross_attention_forward.5} parent=0 // pred_check
    _
  $region7: #{cross_attention_forward.5} parent=0 // pred_check_branch
    %11 = sbr.rel (0) target = $region9
  $region8: #{cross_attention_forward.5} parent=0 // pred_region
    _
  $region9: #{cross_attention_forward.5} parent=0 // pred_fallthru
    _
  // Predicated region
  $region10: #{cross_attention_forward.5} parent=0 // pred_check
    _
  $region11: #{cross_attention_forward.5} parent=0 // pred_check_branch
    %13 = sbr.rel (0) target = $region13
  $region12: #{cross_attention_forward.5} parent=0 // pred_region
    _
  $region13: #{cross_attention_forward.5} parent=0 // pred_fallthru
    _
  %p14 = scmp.eq.s32.totalorder 0, 0
  // Predicated region
  $region14: #{cross_attention_forward.5} parent=0 // pred_check
    %p15 = pneg %p14
  $region15: #{cross_attention_forward.5} parent=0 // pred_check_branch
    %17 = sbr.rel (%p15) target = $region17
  $region16: #{cross_attention_forward.5} parent=0 // pred_region
    %18 = vst [vmem:[#allocation2] sm:$0xff] 0.0
    %19 = vst [vmem:[#allocation2 + $0x8] sm:$0xff] 0.0
    %20 = vst [vmem:[#allocation2 + $0x10] sm:$0xff] 0.0
    %21 = vst [vmem:[#allocation2 + $0x18] sm:$0xff] 0.0
    %22 = vst [vmem:[#allocation2 + $0x20] sm:$0xff] 0.0
    %23 = vst [vmem:[#allocation2 + $0x28] sm:$0xff] 0.0
    %24 = vst [vmem:[#allocation2 + $0x30] sm:$0xff] 0.0
    %25 = vst [vmem:[#allocation2 + $0x38] sm:$0xff] 0.0
  $region17: #{cross_attention_forward.5} parent=0 // pred_fallthru
    _
  %v26 = vld [vmem:[#allocation2] sm:$0xff]
  %v27 = vld [vmem:[#allocation2 + $0x8] sm:$0xff]
  %v28 = vld [vmem:[#allocation2 + $0x10] sm:$0xff]
  %v29 = vld [vmem:[#allocation2 + $0x18] sm:$0xff]
  %v30 = vld [vmem:[#allocation2 + $0x20] sm:$0xff]
  %v31 = vld [vmem:[#allocation2 + $0x28] sm:$0xff]
  %v32 = vld [vmem:[#allocation2 + $0x30] sm:$0xff]
  %v33 = vld [vmem:[#allocation2 + $0x38] sm:$0xff]
  %v34 = vld [vmem:[%s0] sm:$0xff]
  %v35 = vld [vmem:[%s0 + $0x8] sm:$0xff]
  %v36 = vld [vmem:[%s0 + $0x10] sm:$0xff]
  %v37 = vld [vmem:[%s0 + $0x18] sm:$0xff]
  %v38 = vld [vmem:[%s1] sm:$0xff]
  %v39 = vld [vmem:[%s1 + $0x8] sm:$0xff]
  %v40 = vld [vmem:[%s1 + $0x10] sm:$0xff]
  %v41 = vld [vmem:[%s1 + $0x18] sm:$0xff]
  %v42 = vld [vmem:[%s1 + $0x20] sm:$0xff]
  %v43 = vld [vmem:[%s1 + $0x28] sm:$0xff]
  %v44 = vld [vmem:[%s1 + $0x30] sm:$0xff]
  %v45 = vld [vmem:[%s1 + $0x38] sm:$0xff]
  %v46 = vld [vmem:[%s1 + $0x40] sm:$0xff]
  %v47 = vld [vmem:[%s1 + $0x48] sm:$0xff]
  %v48 = vld [vmem:[%s1 + $0x50] sm:$0xff]
  %v49 = vld [vmem:[%s1 + $0x58] sm:$0xff]
  %v50 = vld [vmem:[%s1 + $0x60] sm:$0xff]
  %v51 = vld [vmem:[%s1 + $0x68] sm:$0xff]
  %v52 = vld [vmem:[%s1 + $0x70] sm:$0xff]
  %v53 = vld [vmem:[%s1 + $0x78] sm:$0xff]
  %v54 = vld [vmem:[%s1 + $0x80] sm:$0xff]
  %v55 = vld [vmem:[%s1 + $0x88] sm:$0xff]
  %v56 = vld [vmem:[%s1 + $0x90] sm:$0xff]
  %v57 = vld [vmem:[%s1 + $0x98] sm:$0xff]
  %v58 = vld [vmem:[%s1 + $0xa0] sm:$0xff]
  %v59 = vld [vmem:[%s1 + $0xa8] sm:$0xff]
  %v60 = vld [vmem:[%s1 + $0xb0] sm:$0xff]
  %v61 = vld [vmem:[%s1 + $0xb8] sm:$0xff]
  %v62 = vld [vmem:[%s1 + $0xc0] sm:$0xff]
  %v63 = vld [vmem:[%s1 + $0xc8] sm:$0xff]
  %v64 = vld [vmem:[%s1 + $0xd0] sm:$0xff]
  %v65 = vld [vmem:[%s1 + $0xd8] sm:$0xff]
  %v66 = vld [vmem:[%s1 + $0xe0] sm:$0xff]
  %v67 = vld [vmem:[%s1 + $0xe8] sm:$0xff]
  %v68 = vld [vmem:[%s1 + $0xf0] sm:$0xff]
  %v69 = vld [vmem:[%s1 + $0xf8] sm:$0xff]
  %v70 = vld [vmem:[%s1 + $0x100] sm:$0xff]
  %v71 = vld [vmem:[%s1 + $0x108] sm:$0xff]
  %v72 = vld [vmem:[%s1 + $0x110] sm:$0xff]
  %v73 = vld [vmem:[%s1 + $0x118] sm:$0xff]
  %v74 = vld [vmem:[%s1 + $0x120] sm:$0xff]
  %v75 = vld [vmem:[%s1 + $0x128] sm:$0xff]
  %v76 = vld [vmem:[%s1 + $0x130] sm:$0xff]
  %v77 = vld [vmem:[%s1 + $0x138] sm:$0xff]
  %v78 = vld [vmem:[%s1 + $0x140] sm:$0xff]
  %v79 = vld [vmem:[%s1 + $0x148] sm:$0xff]
  %v80 = vld [vmem:[%s1 + $0x150] sm:$0xff]
  %v81 = vld [vmem:[%s1 + $0x158] sm:$0xff]
  %v82 = vld [vmem:[%s1 + $0x160] sm:$0xff]
  %v83 = vld [vmem:[%s1 + $0x168] sm:$0xff]
  %v84 = vld [vmem:[%s1 + $0x170] sm:$0xff]
  %v85 = vld [vmem:[%s1 + $0x178] sm:$0xff]
  %v86 = vld [vmem:[%s1 + $0x180] sm:$0xff]
  %v87 = vld [vmem:[%s1 + $0x188] sm:$0xff]
  %v88 = vld [vmem:[%s1 + $0x190] sm:$0xff]
  %v89 = vld [vmem:[%s1 + $0x198] sm:$0xff]
  %v90 = vld [vmem:[%s1 + $0x1a0] sm:$0xff]
  %v91 = vld [vmem:[%s1 + $0x1a8] sm:$0xff]
  %v92 = vld [vmem:[%s1 + $0x1b0] sm:$0xff]
  %v93 = vld [vmem:[%s1 + $0x1b8] sm:$0xff]
  %v94 = vld [vmem:[%s1 + $0x1c0] sm:$0xff]
  %v95 = vld [vmem:[%s1 + $0x1c8] sm:$0xff]
  %v96 = vld [vmem:[%s1 + $0x1d0] sm:$0xff]
  %v97 = vld [vmem:[%s1 + $0x1d8] sm:$0xff]
  %v98 = vld [vmem:[%s1 + $0x1e0] sm:$0xff]
  %v99 = vld [vmem:[%s1 + $0x1e8] sm:$0xff]
  %v100 = vld [vmem:[%s1 + $0x1f0] sm:$0xff]
  %v101 = vld [vmem:[%s1 + $0x1f8] sm:$0xff]
  %v102 = vld [vmem:[%s1 + $0x200] sm:$0xff]
  %v103 = vld [vmem:[%s1 + $0x208] sm:$0xff]
  %v104 = vld [vmem:[%s1 + $0x210] sm:$0xff]
  %v105 = vld [vmem:[%s1 + $0x218] sm:$0xff]
  %v106 = vld [vmem:[%s1 + $0x220] sm:$0xff]
  %v107 = vld [vmem:[%s1 + $0x228] sm:$0xff]
  %v108 = vld [vmem:[%s1 + $0x230] sm:$0xff]
  %v109 = vld [vmem:[%s1 + $0x238] sm:$0xff]
  %v110 = vld [vmem:[%s1 + $0x240] sm:$0xff]
  %v111 = vld [vmem:[%s1 + $0x248] sm:$0xff]
  %v112 = vld [vmem:[%s1 + $0x250] sm:$0xff]
  %v113 = vld [vmem:[%s1 + $0x258] sm:$0xff]
  %v114 = vld [vmem:[%s1 + $0x260] sm:$0xff]
  %v115 = vld [vmem:[%s1 + $0x268] sm:$0xff]
  %v116 = vld [vmem:[%s1 + $0x270] sm:$0xff]
  %v117 = vld [vmem:[%s1 + $0x278] sm:$0xff]
  %v118 = vld [vmem:[%s1 + $0x280] sm:$0xff]
  %v119 = vld [vmem:[%s1 + $0x288] sm:$0xff]
  %v120 = vld [vmem:[%s1 + $0x290] sm:$0xff]
  %v121 = vld [vmem:[%s1 + $0x298] sm:$0xff]
  %v122 = vld [vmem:[%s1 + $0x2a0] sm:$0xff]
  %v123 = vld [vmem:[%s1 + $0x2a8] sm:$0xff]
  %v124 = vld [vmem:[%s1 + $0x2b0] sm:$0xff]
  %v125 = vld [vmem:[%s1 + $0x2b8] sm:$0xff]
  %v126 = vld [vmem:[%s1 + $0x2c0] sm:$0xff]
  %v127 = vld [vmem:[%s1 + $0x2c8] sm:$0xff]
  %v128 = vld [vmem:[%s1 + $0x2d0] sm:$0xff]
  %v129 = vld [vmem:[%s1 + $0x2d8] sm:$0xff]
  %v130 = vld [vmem:[%s1 + $0x2e0] sm:$0xff]
  %v131 = vld [vmem:[%s1 + $0x2e8] sm:$0xff]
  %v132 = vld [vmem:[%s1 + $0x2f0] sm:$0xff]
  %v133 = vld [vmem:[%s1 + $0x2f8] sm:$0xff]
  %v134 = vld [vmem:[%s1 + $0x300] sm:$0xff]
  %v135 = vld [vmem:[%s1 + $0x308] sm:$0xff]
  %v136 = vld [vmem:[%s1 + $0x310] sm:$0xff]
  %v137 = vld [vmem:[%s1 + $0x318] sm:$0xff]
  %v138 = vld [vmem:[%s1 + $0x320] sm:$0xff]
  %v139 = vld [vmem:[%s1 + $0x328] sm:$0xff]
  %v140 = vld [vmem:[%s1 + $0x330] sm:$0xff]
  %v141 = vld [vmem:[%s1 + $0x338] sm:$0xff]
  %v142 = vld [vmem:[%s1 + $0x340] sm:$0xff]
  %v143 = vld [vmem:[%s1 + $0x348] sm:$0xff]
  %v144 = vld [vmem:[%s1 + $0x350] sm:$0xff]
  %v145 = vld [vmem:[%s1 + $0x358] sm:$0xff]
  %v146 = vld [vmem:[%s1 + $0x360] sm:$0xff]
  %v147 = vld [vmem:[%s1 + $0x368] sm:$0xff]
  %v148 = vld [vmem:[%s1 + $0x370] sm:$0xff]
  %v149 = vld [vmem:[%s1 + $0x378] sm:$0xff]
  %v150 = vld [vmem:[%s1 + $0x380] sm:$0xff]
  %v151 = vld [vmem:[%s1 + $0x388] sm:$0xff]
  %v152 = vld [vmem:[%s1 + $0x390] sm:$0xff]
  %v153 = vld [vmem:[%s1 + $0x398] sm:$0xff]
  %v154 = vld [vmem:[%s1 + $0x3a0] sm:$0xff]
  %v155 = vld [vmem:[%s1 + $0x3a8] sm:$0xff]
  %v156 = vld [vmem:[%s1 + $0x3b0] sm:$0xff]
  %v157 = vld [vmem:[%s1 + $0x3b8] sm:$0xff]
  %v158 = vld [vmem:[%s1 + $0x3c0] sm:$0xff]
  %v159 = vld [vmem:[%s1 + $0x3c8] sm:$0xff]
  %v160 = vld [vmem:[%s1 + $0x3d0] sm:$0xff]
  %v161 = vld [vmem:[%s1 + $0x3d8] sm:$0xff]
  %v162 = vld [vmem:[%s1 + $0x3e0] sm:$0xff]
  %v163 = vld [vmem:[%s1 + $0x3e8] sm:$0xff]
  %v164 = vld [vmem:[%s1 + $0x3f0] sm:$0xff]
  %v165 = vld [vmem:[%s1 + $0x3f8] sm:$0xff]
  %166 = vmatprep.subr.mxu0 %v99
  %167 = vmatpush1.msra.mxu0 %v98
  %168 = vmatprep.subr.mxu0 %v95
  %169 = vmatpush1.msra.mxu0 %v94
  %170 = vmatprep.subr.mxu0 %v91
  %171 = vmatpush1.msra.mxu0 %v90
  %172 = vmatprep.subr.mxu0 %v87
  %173 = vmatpush1.msra.mxu0 %v86
  %174 = vmatprep.subr.mxu0 %v83
  %175 = vmatpush1.msra.mxu0 %v82
  %176 = vmatprep.subr.mxu0 %v79
  %177 = vmatpush1.msra.mxu0 %v78
  %178 = vmatprep.subr.mxu0 %v75
  %179 = vmatpush1.msra.mxu0 %v74
  %180 = vmatprep.subr.mxu0 %v71
  %181 = vmatpush1.msra.mxu0 %v70
  %182 = vmatprep.subr.mxu0 %v67
  %183 = vmatpush1.msra.mxu0 %v66
  %184 = vmatprep.subr.mxu0 %v63
  %185 = vmatpush1.msra.mxu0 %v62
  %186 = vmatprep.subr.mxu0 %v59
  %187 = vmatpush1.msra.mxu0 %v58
  %188 = vmatprep.subr.mxu0 %v55
  %189 = vmatpush1.msra.mxu0 %v54
  %190 = vmatprep.subr.mxu0 %v51
  %191 = vmatpush1.msra.mxu0 %v50
  %192 = vmatprep.subr.mxu0 %v47
  %193 = vmatpush1.msra.mxu0 %v46
  %194 = vmatprep.subr.mxu0 %v43
  %195 = vmatpush1.msra.mxu0 %v42
  %196 = vmatprep.subr.mxu0 %v39
  %197 = vmatpush1.msra.mxu0 %v38
  %198 = vmatprep.subr.mxu0 %v163
  %199 = vmatpush2.msra.mxu0 %v162
  %200 = vmatprep.subr.mxu0 %v159
  %201 = vmatpush2.msra.mxu0 %v158
  %202 = vmatprep.subr.mxu0 %v155
  %203 = vmatpush2.msra.mxu0 %v154
  %204 = vmatprep.subr.mxu0 %v151
  %205 = vmatpush2.msra.mxu0 %v150
  %206 = vmatprep.subr.mxu0 %v147
  %207 = vmatpush2.msra.mxu0 %v146
  %208 = vmatprep.subr.mxu0 %v143
  %209 = vmatpush2.msra.mxu0 %v142
  %210 = vmatprep.subr.mxu0 %v139
  %211 = vmatpush2.msra.mxu0 %v138
  %212 = vmatprep.subr.mxu0 %v135
  %213 = vmatpush2.msra.mxu0 %v134
  %214 = vmatprep.subr.mxu0 %v131
  %215 = vmatpush2.msra.mxu0 %v130
  %216 = vmatprep.subr.mxu0 %v127
  %217 = vmatpush2.msra.mxu0 %v126
  %218 = vmatprep.subr.mxu0 %v123
  %219 = vmatpush2.msra.mxu0 %v122
  %220 = vmatprep.subr.mxu0 %v119
  %221 = vmatpush2.msra.mxu0 %v118
  %222 = vmatprep.subr.mxu0 %v115
  %223 = vmatpush2.msra.mxu0 %v114
  %224 = vmatprep.subr.mxu0 %v111
  %225 = vmatpush2.msra.mxu0 %v110
  %226 = vmatprep.subr.mxu0 %v107
  %227 = vmatpush2.msra.mxu0 %v106
  %228 = vmatprep.subr.mxu0 %v103
  %229 = vmatpush2.msra.mxu0 %v102
  %230 = vmatprep.mubr.f32.mxu0 %v35
  %231 = vmatmul.mubr.f32.gmra.mxu0 %v34
  %v232 = vpop.f32.mrf.mxu0
  %v233 = vadd.f32 0.0, %v232
  %v234 = vpop.f32.mrf.mxu0
  %v235 = vadd.f32 0.0, %v234
  %236 = vmatprep.mubr.f32.mxu0 %v37
  %237 = vmatmul.mubr.f32.gmra.mxu0 %v36
  %v238 = vpop.f32.mrf.mxu0
  %v239 = vadd.f32 0.0, %v238
  %v240 = vpop.f32.mrf.mxu0
  %v241 = vadd.f32 0.0, %v240
  %242 = vdwg.mxu0
  %243 = vmatprep.subr.mxu0 %v101
  %244 = vmatpush1.msra.mxu0 %v100
  %245 = vmatprep.subr.mxu0 %v97
  %246 = vmatpush1.msra.mxu0 %v96
  %247 = vmatprep.subr.mxu0 %v93
  %248 = vmatpush1.msra.mxu0 %v92
  %249 = vmatprep.subr.mxu0 %v89
  %250 = vmatpush1.msra.mxu0 %v88
  %251 = vmatprep.subr.mxu0 %v85
  %252 = vmatpush1.msra.mxu0 %v84
  %253 = vmatprep.subr.mxu0 %v81
  %254 = vmatpush1.msra.mxu0 %v80
  %255 = vmatprep.subr.mxu0 %v77
  %256 = vmatpush1.msra.mxu0 %v76
  %257 = vmatprep.subr.mxu0 %v73
  %258 = vmatpush1.msra.mxu0 %v72
  %259 = vmatprep.subr.mxu0 %v69
  %260 = vmatpush1.msra.mxu0 %v68
  %261 = vmatprep.subr.mxu0 %v65
  %262 = vmatpush1.msra.mxu0 %v64
  %263 = vmatprep.subr.mxu0 %v61
  %264 = vmatpush1.msra.mxu0 %v60
  %265 = vmatprep.subr.mxu0 %v57
  %266 = vmatpush1.msra.mxu0 %v56
  %267 = vmatprep.subr.mxu0 %v53
  %268 = vmatpush1.msra.mxu0 %v52
  %269 = vmatprep.subr.mxu0 %v49
  %270 = vmatpush1.msra.mxu0 %v48
  %271 = vmatprep.subr.mxu0 %v45
  %272 = vmatpush1.msra.mxu0 %v44
  %273 = vmatprep.subr.mxu0 %v41
  %274 = vmatpush1.msra.mxu0 %v40
  %275 = vmatprep.subr.mxu0 %v165
  %276 = vmatpush2.msra.mxu0 %v164
  %277 = vmatprep.subr.mxu0 %v161
  %278 = vmatpush2.msra.mxu0 %v160
  %279 = vmatprep.subr.mxu0 %v157
  %280 = vmatpush2.msra.mxu0 %v156
  %281 = vmatprep.subr.mxu0 %v153
  %282 = vmatpush2.msra.mxu0 %v152
  %283 = vmatprep.subr.mxu0 %v149
  %284 = vmatpush2.msra.mxu0 %v148
  %285 = vmatprep.subr.mxu0 %v145
  %286 = vmatpush2.msra.mxu0 %v144
  %287 = vmatprep.subr.mxu0 %v141
  %288 = vmatpush2.msra.mxu0 %v140
  %289 = vmatprep.subr.mxu0 %v137
  %290 = vmatpush2.msra.mxu0 %v136
  %291 = vmatprep.subr.mxu0 %v133
  %292 = vmatpush2.msra.mxu0 %v132
  %293 = vmatprep.subr.mxu0 %v129
  %294 = vmatpush2.msra.mxu0 %v128
  %295 = vmatprep.subr.mxu0 %v125
  %296 = vmatpush2.msra.mxu0 %v124
  %297 = vmatprep.subr.mxu0 %v121
  %298 = vmatpush2.msra.mxu0 %v120
  %299 = vmatprep.subr.mxu0 %v117
  %300 = vmatpush2.msra.mxu0 %v116
  %301 = vmatprep.subr.mxu0 %v113
  %302 = vmatpush2.msra.mxu0 %v112
  %303 = vmatprep.subr.mxu0 %v109
  %304 = vmatpush2.msra.mxu0 %v108
  %305 = vmatprep.subr.mxu0 %v105
  %306 = vmatpush2.msra.mxu0 %v104
  %307 = vmatprep.mubr.f32.mxu0 %v35
  %308 = vmatmul.mubr.f32.gmra.mxu0 %v34
  %v309 = vpop.f32.mrf.mxu0
  %v310 = vadd.f32 0.0, %v309
  %v311 = vpop.f32.mrf.mxu0
  %v312 = vadd.f32 0.0, %v311
  %313 = vmatprep.mubr.f32.mxu0 %v37
  %314 = vmatmul.mubr.f32.gmra.mxu0 %v36
  %v315 = vpop.f32.mrf.mxu0
  %v316 = vadd.f32 0.0, %v315
  %v317 = vpop.f32.mrf.mxu0
  %v318 = vadd.f32 0.0, %v317
  %319 = vdwg.mxu0
  %v320 = vadd.f32 %v26, %v233
  %v321 = vadd.f32 %v27, %v235
  %v322 = vadd.f32 %v28, %v310
  %v323 = vadd.f32 %v29, %v312
  %v324 = vadd.f32 %v30, %v239
  %v325 = vadd.f32 %v31, %v241
  %v326 = vadd.f32 %v32, %v316
  %v327 = vadd.f32 %v33, %v318
  %328 = vst [vmem:[#allocation2] sm:$0xff] %v320
  %329 = vst [vmem:[#allocation2 + $0x8] sm:$0xff] %v321
  %330 = vst [vmem:[#allocation2 + $0x10] sm:$0xff] %v322
  %331 = vst [vmem:[#allocation2 + $0x18] sm:$0xff] %v323
  %332 = vst [vmem:[#allocation2 + $0x20] sm:$0xff] %v324
  %333 = vst [vmem:[#allocation2 + $0x28] sm:$0xff] %v325
  %334 = vst [vmem:[#allocation2 + $0x30] sm:$0xff] %v326
  %335 = vst [vmem:[#allocation2 + $0x38] sm:$0xff] %v327
  // Predicated region
  $region18: #{cross_attention_forward.5} parent=0 // pred_check
    %p336 = pneg %p14
  $region19: #{cross_attention_forward.5} parent=0 // pred_check_branch
    %338 = sbr.rel (%p336) target = $region21
  $region20: #{cross_attention_forward.5} parent=0 // pred_region
    %v339 = vld [vmem:[#allocation2] sm:$0xff]
    %v340 = vld [vmem:[#allocation2 + $0x8] sm:$0xff]
    %v341 = vld [vmem:[#allocation2 + $0x10] sm:$0xff]
    %v342 = vld [vmem:[#allocation2 + $0x18] sm:$0xff]
    %v343 = vld [vmem:[#allocation2 + $0x20] sm:$0xff]
    %v344 = vld [vmem:[#allocation2 + $0x28] sm:$0xff]
    %v345 = vld [vmem:[#allocation2 + $0x30] sm:$0xff]
    %v346 = vld [vmem:[#allocation2 + $0x38] sm:$0xff]
    %v347 = vld [vmem:[%s2] sm:$0xf]
    %v349 = vlaneseq
    %v350 = vshrl.u32 %v349, 7
    %v351 = vsub.s32 0, %v350
    %v352 = vrot.slane %v347, %v351
    %v353 = vlaneseq
    %v354 = vshrl.u32 %v353, 7
    %v355 = vsub.s32 1, %v354
    %v356 = vrot.slane %v347, %v355
    %v357 = vlaneseq
    %v358 = vshrl.u32 %v357, 7
    %v359 = vsub.s32 2, %v358
    %v360 = vrot.slane %v347, %v359
    %v361 = vlaneseq
    %v362 = vshrl.u32 %v361, 7
    %v363 = vsub.s32 3, %v362
    %v364 = vrot.slane %v347, %v363
    %v369 = vadd.f32 %v339, %v352
    %v370 = vadd.f32 %v340, %v356
    %v371 = vadd.f32 %v341, %v360
    %v372 = vadd.f32 %v342, %v364
    %v373 = vadd.f32 %v343, %v352
    %v374 = vadd.f32 %v344, %v356
    %v375 = vadd.f32 %v345, %v360
    %v376 = vadd.f32 %v346, %v364
    %377 = vst [vmem:[%s3] sm:$0xff] %v369
    %378 = vst [vmem:[%s3 + $0x8] sm:$0xff] %v370
    %379 = vst [vmem:[%s3 + $0x10] sm:$0xff] %v371
    %380 = vst [vmem:[%s3 + $0x18] sm:$0xff] %v372
    %381 = vst [vmem:[%s3 + $0x20] sm:$0xff] %v373
    %382 = vst [vmem:[%s3 + $0x28] sm:$0xff] %v374
    %383 = vst [vmem:[%s3 + $0x30] sm:$0xff] %v375
    %384 = vst [vmem:[%s3 + $0x38] sm:$0xff] %v376
  $region21: #{cross_attention_forward.5} parent=0 // pred_fallthru
    _
  // Predicated region
  $region22: #{cross_attention_forward.5} parent=0 // pred_check
    _
  $region23: #{cross_attention_forward.5} parent=0 // pred_check_branch
    %386 = sbr.rel (0) target = $region25
  $region24: #{cross_attention_forward.5} parent=0 // pred_region
    _
  $region25: #{cross_attention_forward.5} parent=0 // pred_fallthru
    _
  // Predicated region
  $region26: #{cross_attention_forward.5} parent=0 // pred_check
    _
  $region27: #{cross_attention_forward.5} parent=0 // pred_check_branch
    %388 = sbr.rel (0) target = $region29
  $region28: #{cross_attention_forward.5} parent=0 // pred_region
    _
  $region29: #{cross_attention_forward.5} parent=0 // pred_fallthru
    _

// kernel: cross_attention_forward.7
$region0: #{cross_attention_forward.7}
  #allocation0 [shape = 'u32[]', space=smem, size = 0x4, offset = 0x4, fixed_abs, tag = 'smem constant byte address 0x4 - core index']
  #allocation1 [shape = 'u32[144,128]{1,0:T(1,128)}', space=vmem, size = 0x12000, scoped, tag = 'internal scratch']
  #allocation2 [shape = 'f32[16,256]{1,0:T(8,128)}', space=vmem, size = 0x4000, scoped, tag = 'scratch operand']
  %s0 = inlined_call_operand.vmem [shape: f32[16,256], index: 0, kind: input, shape index: {}]
  %s1 = inlined_call_operand.vmem [shape: f32[256,256], index: 1, kind: input, shape index: {}]
  %s2 = inlined_call_operand.vmem [shape: f32[1,256], index: 2, kind: input, shape index: {}]
  %s3 = inlined_call_operand.hbm [shape: f32[16,256], index: 3, kind: output, shape index: {}]
  %s4 = sld [smem:[#allocation0]]
  $region30: #{cross_attention_forward.7} parent=0
    _
  %s6 = ssub.s32 1, %s4
  %s7 = scalar_select 0, %s6, %s4
  $region1: #{cross_attention_forward.7} parent=0
    #allocation3 [shape = 'u8[16384]{0}', space=vmem, size = 0x4000, scoped, tag = 'output window, operand 0, single buffered']
    #allocation4 [shape = 's32[1]{0}', space=sflag, size = 0x4, scoped, tag = 'scoped memory for cross_attention_forward.7']
    %8 = vsyncpa [#allocation4], 0
    // Predicated region
    $region2: #{cross_attention_forward.7} parent=1 // pred_check
      _
    $region3: #{cross_attention_forward.7} parent=1 // pred_check_branch
      %10 = sbr.rel (0) target = $region5
    $region4: #{cross_attention_forward.7} parent=1 // pred_region
      _
    $region5: #{cross_attention_forward.7} parent=1 // pred_fallthru
      _
    // Predicated region
    $region6: #{cross_attention_forward.7} parent=1 // pred_check
      _
    $region7: #{cross_attention_forward.7} parent=1 // pred_check_branch
      %12 = sbr.rel (0) target = $region9
    $region8: #{cross_attention_forward.7} parent=1 // pred_region
      _
    $region9: #{cross_attention_forward.7} parent=1 // pred_fallthru
      _
    // Predicated region
    $region10: #{cross_attention_forward.7} parent=1 // pred_check
      _
    $region11: #{cross_attention_forward.7} parent=1 // pred_check_branch
      %14 = sbr.rel (0) target = $region13
    $region12: #{cross_attention_forward.7} parent=1 // pred_region
      _
    $region13: #{cross_attention_forward.7} parent=1 // pred_fallthru
      _
    %p15 = scmp.eq.s32.totalorder 0, 0
    // Predicated region
    $region14: #{cross_attention_forward.7} parent=1 // pred_check
      %p16 = pneg %p15
    $region15: #{cross_attention_forward.7} parent=1 // pred_check_branch
      %18 = sbr.rel (%p16) target = $region17
    $region16: #{cross_attention_forward.7} parent=1 // pred_region
      %19 = vst [vmem:[#allocation2] sm:$0xff] 0.0
      %20 = vst [vmem:[#allocation2 + $0x8] sm:$0xff] 0.0
      %21 = vst [vmem:[#allocation2 + $0x10] sm:$0xff] 0.0
      %22 = vst [vmem:[#allocation2 + $0x18] sm:$0xff] 0.0
    $region17: #{cross_attention_forward.7} parent=1 // pred_fallthru
      _
    %v23 = vld [vmem:[#allocation2] sm:$0xff]
    %v24 = vld [vmem:[#allocation2 + $0x8] sm:$0xff]
    %v25 = vld [vmem:[#allocation2 + $0x10] sm:$0xff]
    %v26 = vld [vmem:[#allocation2 + $0x18] sm:$0xff]
    %v27 = vld [vmem:[%s0] sm:$0xff]
    %v28 = vld [vmem:[%s0 + $0x8] sm:$0xff]
    %v29 = vld [vmem:[%s0 + $0x10] sm:$0xff]
    %v30 = vld [vmem:[%s0 + $0x18] sm:$0xff]
    %v31 = vld [vmem:[%s1] sm:$0xff]
    %v32 = vld [vmem:[%s1 + $0x8] sm:$0xff]
    %v33 = vld [vmem:[%s1 + $0x10] sm:$0xff]
    %v34 = vld [vmem:[%s1 + $0x18] sm:$0xff]
    %v35 = vld [vmem:[%s1 + $0x20] sm:$0xff]
    %v36 = vld [vmem:[%s1 + $0x28] sm:$0xff]
    %v37 = vld [vmem:[%s1 + $0x30] sm:$0xff]
    %v38 = vld [vmem:[%s1 + $0x38] sm:$0xff]
    %v39 = vld [vmem:[%s1 + $0x40] sm:$0xff]
    %v40 = vld [vmem:[%s1 + $0x48] sm:$0xff]
    %v41 = vld [vmem:[%s1 + $0x50] sm:$0xff]
    %v42 = vld [vmem:[%s1 + $0x58] sm:$0xff]
    %v43 = vld [vmem:[%s1 + $0x60] sm:$0xff]
    %v44 = vld [vmem:[%s1 + $0x68] sm:$0xff]
    %v45 = vld [vmem:[%s1 + $0x70] sm:$0xff]
    %v46 = vld [vmem:[%s1 + $0x78] sm:$0xff]
    %v47 = vld [vmem:[%s1 + $0x80] sm:$0xff]
    %v48 = vld [vmem:[%s1 + $0x88] sm:$0xff]
    %v49 = vld [vmem:[%s1 + $0x90] sm:$0xff]
    %v50 = vld [vmem:[%s1 + $0x98] sm:$0xff]
    %v51 = vld [vmem:[%s1 + $0xa0] sm:$0xff]
    %v52 = vld [vmem:[%s1 + $0xa8] sm:$0xff]
    %v53 = vld [vmem:[%s1 + $0xb0] sm:$0xff]
    %v54 = vld [vmem:[%s1 + $0xb8] sm:$0xff]
    %v55 = vld [vmem:[%s1 + $0xc0] sm:$0xff]
    %v56 = vld [vmem:[%s1 + $0xc8] sm:$0xff]
    %v57 = vld [vmem:[%s1 + $0xd0] sm:$0xff]
    %v58 = vld [vmem:[%s1 + $0xd8] sm:$0xff]
    %v59 = vld [vmem:[%s1 + $0xe0] sm:$0xff]
    %v60 = vld [vmem:[%s1 + $0xe8] sm:$0xff]
    %v61 = vld [vmem:[%s1 + $0xf0] sm:$0xff]
    %v62 = vld [vmem:[%s1 + $0xf8] sm:$0xff]
    %v63 = vld [vmem:[%s1 + $0x100] sm:$0xff]
    %v64 = vld [vmem:[%s1 + $0x108] sm:$0xff]
    %v65 = vld [vmem:[%s1 + $0x110] sm:$0xff]
    %v66 = vld [vmem:[%s1 + $0x118] sm:$0xff]
    %v67 = vld [vmem:[%s1 + $0x120] sm:$0xff]
    %v68 = vld [vmem:[%s1 + $0x128] sm:$0xff]
    %v69 = vld [vmem:[%s1 + $0x130] sm:$0xff]
    %v70 = vld [vmem:[%s1 + $0x138] sm:$0xff]
    %v71 = vld [vmem:[%s1 + $0x140] sm:$0xff]
    %v72 = vld [vmem:[%s1 + $0x148] sm:$0xff]
    %v73 = vld [vmem:[%s1 + $0x150] sm:$0xff]
    %v74 = vld [vmem:[%s1 + $0x158] sm:$0xff]
    %v75 = vld [vmem:[%s1 + $0x160] sm:$0xff]
    %v76 = vld [vmem:[%s1 + $0x168] sm:$0xff]
    %v77 = vld [vmem:[%s1 + $0x170] sm:$0xff]
    %v78 = vld [vmem:[%s1 + $0x178] sm:$0xff]
    %v79 = vld [vmem:[%s1 + $0x180] sm:$0xff]
    %v80 = vld [vmem:[%s1 + $0x188] sm:$0xff]
    %v81 = vld [vmem:[%s1 + $0x190] sm:$0xff]
    %v82 = vld [vmem:[%s1 + $0x198] sm:$0xff]
    %v83 = vld [vmem:[%s1 + $0x1a0] sm:$0xff]
    %v84 = vld [vmem:[%s1 + $0x1a8] sm:$0xff]
    %v85 = vld [vmem:[%s1 + $0x1b0] sm:$0xff]
    %v86 = vld [vmem:[%s1 + $0x1b8] sm:$0xff]
    %v87 = vld [vmem:[%s1 + $0x1c0] sm:$0xff]
    %v88 = vld [vmem:[%s1 + $0x1c8] sm:$0xff]
    %v89 = vld [vmem:[%s1 + $0x1d0] sm:$0xff]
    %v90 = vld [vmem:[%s1 + $0x1d8] sm:$0xff]
    %v91 = vld [vmem:[%s1 + $0x1e0] sm:$0xff]
    %v92 = vld [vmem:[%s1 + $0x1e8] sm:$0xff]
    %v93 = vld [vmem:[%s1 + $0x1f0] sm:$0xff]
    %v94 = vld [vmem:[%s1 + $0x1f8] sm:$0xff]
    %95 = vmatprep.subr.mxu0 %v62
    %96 = vmatpush1.msra.mxu0 %v61
    %97 = vmatprep.subr.mxu0 %v60
    %98 = vmatpush1.msra.mxu0 %v59
    %99 = vmatprep.subr.mxu0 %v58
    %100 = vmatpush1.msra.mxu0 %v57
    %101 = vmatprep.subr.mxu0 %v56
    %102 = vmatpush1.msra.mxu0 %v55
    %103 = vmatprep.subr.mxu0 %v54
    %104 = vmatpush1.msra.mxu0 %v53
    %105 = vmatprep.subr.mxu0 %v52
    %106 = vmatpush1.msra.mxu0 %v51
    %107 = vmatprep.subr.mxu0 %v50
    %108 = vmatpush1.msra.mxu0 %v49
    %109 = vmatprep.subr.mxu0 %v48
    %110 = vmatpush1.msra.mxu0 %v47
    %111 = vmatprep.subr.mxu0 %v46
    %112 = vmatpush1.msra.mxu0 %v45
    %113 = vmatprep.subr.mxu0 %v44
    %114 = vmatpush1.msra.mxu0 %v43
    %115 = vmatprep.subr.mxu0 %v42
    %116 = vmatpush1.msra.mxu0 %v41
    %117 = vmatprep.subr.mxu0 %v40
    %118 = vmatpush1.msra.mxu0 %v39
    %119 = vmatprep.subr.mxu0 %v38
    %120 = vmatpush1.msra.mxu0 %v37
    %121 = vmatprep.subr.mxu0 %v36
    %122 = vmatpush1.msra.mxu0 %v35
    %123 = vmatprep.subr.mxu0 %v34
    %124 = vmatpush1.msra.mxu0 %v33
    %125 = vmatprep.subr.mxu0 %v32
    %126 = vmatpush1.msra.mxu0 %v31
    %127 = vmatprep.subr.mxu0 %v94
    %128 = vmatpush2.msra.mxu0 %v93
    %129 = vmatprep.subr.mxu0 %v92
    %130 = vmatpush2.msra.mxu0 %v91
    %131 = vmatprep.subr.mxu0 %v90
    %132 = vmatpush2.msra.mxu0 %v89
    %133 = vmatprep.subr.mxu0 %v88
    %134 = vmatpush2.msra.mxu0 %v87
    %135 = vmatprep.subr.mxu0 %v86
    %136 = vmatpush2.msra.mxu0 %v85
    %137 = vmatprep.subr.mxu0 %v84
    %138 = vmatpush2.msra.mxu0 %v83
    %139 = vmatprep.subr.mxu0 %v82
    %140 = vmatpush2.msra.mxu0 %v81
    %141 = vmatprep.subr.mxu0 %v80
    %142 = vmatpush2.msra.mxu0 %v79
    %143 = vmatprep.subr.mxu0 %v78
    %144 = vmatpush2.msra.mxu0 %v77
    %145 = vmatprep.subr.mxu0 %v76
    %146 = vmatpush2.msra.mxu0 %v75
    %147 = vmatprep.subr.mxu0 %v74
    %148 = vmatpush2.msra.mxu0 %v73
    %149 = vmatprep.subr.mxu0 %v72
    %150 = vmatpush2.msra.mxu0 %v71
    %151 = vmatprep.subr.mxu0 %v70
    %152 = vmatpush2.msra.mxu0 %v69
    %153 = vmatprep.subr.mxu0 %v68
    %154 = vmatpush2.msra.mxu0 %v67
    %155 = vmatprep.subr.mxu0 %v66
    %156 = vmatpush2.msra.mxu0 %v65
    %157 = vmatprep.subr.mxu0 %v64
    %158 = vmatpush2.msra.mxu0 %v63
    %159 = vmatprep.mubr.f32.mxu0 %v28
    %160 = vmatmul.mubr.f32.gmra.mxu0 %v27
    %v161 = vpop.f32.mrf.mxu0
    %v162 = vadd.f32 0.0, %v161
    %v163 = vpop.f32.mrf.mxu0
    %v164 = vadd.f32 0.0, %v163
    %165 = vmatprep.mubr.f32.mxu0 %v30
    %166 = vmatmul.mubr.f32.gmra.mxu0 %v29
    %v167 = vpop.f32.mrf.mxu0
    %v168 = vadd.f32 0.0, %v167
    %v169 = vpop.f32.mrf.mxu0
    %v170 = vadd.f32 0.0, %v169
    %171 = vdwg.mxu0
    %v172 = vadd.f32 %v23, %v162
    %v173 = vadd.f32 %v24, %v164
    %v174 = vadd.f32 %v25, %v168
    %v175 = vadd.f32 %v26, %v170
    %176 = vst [vmem:[#allocation2] sm:$0xff] %v172
    %177 = vst [vmem:[#allocation2 + $0x8] sm:$0xff] %v173
    %178 = vst [vmem:[#allocation2 + $0x10] sm:$0xff] %v174
    %179 = vst [vmem:[#allocation2 + $0x18] sm:$0xff] %v175
    // Predicated region
    $region18: #{cross_attention_forward.7} parent=1 // pred_check
      %p180 = pneg %p15
    $region19: #{cross_attention_forward.7} parent=1 // pred_check_branch
      %182 = sbr.rel (%p180) target = $region21
    $region20: #{cross_attention_forward.7} parent=1 // pred_region
      %v183 = vld [vmem:[#allocation2] sm:$0xff]
      %v184 = vld [vmem:[#allocation2 + $0x8] sm:$0xff]
      %v185 = vld [vmem:[#allocation2 + $0x10] sm:$0xff]
      %v186 = vld [vmem:[#allocation2 + $0x18] sm:$0xff]
      %v187 = vld [vmem:[%s2] sm:$0x3]
      %v189 = vlaneseq
      %v190 = vshrl.u32 %v189, 7
      %v191 = vsub.s32 0, %v190
      %v192 = vrot.slane %v187, %v191
      %v193 = vlaneseq
      %v194 = vshrl.u32 %v193, 7
      %v195 = vsub.s32 1, %v194
      %v196 = vrot.slane %v187, %v195
      %v199 = vadd.f32 %v183, %v192
      %v200 = vadd.f32 %v184, %v196
      %v201 = vadd.f32 %v185, %v192
      %v202 = vadd.f32 %v186, %v196
      %203 = vst [vmem:[#allocation3] sm:$0xff] %v199
      %204 = vst [vmem:[#allocation3 + $0x8] sm:$0xff] %v200
      %205 = vst [vmem:[#allocation3 + $0x10] sm:$0xff] %v201
      %206 = vst [vmem:[#allocation3 + $0x18] sm:$0xff] %v202
    $region21: #{cross_attention_forward.7} parent=1 // pred_fallthru
      _
    // Predicated region
    $region22: #{cross_attention_forward.7} parent=1 // pred_check
      _
    $region23: #{cross_attention_forward.7} parent=1 // pred_check_branch
      %208 = sbr.rel (0) target = $region25
    $region24: #{cross_attention_forward.7} parent=1 // pred_region
      %s210 = ssub.s32 512, 512
      %211 = vsyncadd [#allocation4], %s210
      %s212 = sshll.u32 [#allocation3], 4
      %s213 = int_to_ptr.vmem [resolvable:$true] %s212
      %218 = dma.vmem_to_hbm [thread:$0]  %s213, 512, %s3, [#allocation4], 256, 256, 16
    $region25: #{cross_attention_forward.7} parent=1 // pred_fallthru
      _
    // Predicated region
    $region26: #{cross_attention_forward.7} parent=1 // pred_check
      _
    $region27: #{cross_attention_forward.7} parent=1 // pred_check_branch
      %220 = sbr.rel (0) target = $region29
    $region28: #{cross_attention_forward.7} parent=1 // pred_region
      %221 = dma.done [#allocation4], 512
    $region29: #{cross_attention_forward.7} parent=1 // pred_fallthru
      _
    %222 = vsyncpa [#allocation4], 1

// kernel: cross_attention_forward.6
$region0: #{cross_attention_forward.6}
  #allocation0 [shape = 'u32[]', space=smem, size = 0x4, offset = 0x4, fixed_abs, tag = 'smem constant byte address 0x4 - core index']
  #allocation1 [shape = 'u32[144,128]{1,0:T(1,128)}', space=vmem, size = 0x12000, scoped, tag = 'internal scratch']
  #allocation2 [shape = 'f32[8,1]{1,0:T(8,128)}', space=vmem, size = 0x1000, scoped, tag = 'scratch operand']
  #allocation3 [shape = 'f32[8,1]{1,0:T(8,128)}', space=vmem, size = 0x1000, scoped, tag = 'scratch operand']
  #allocation4 [shape = 'f32[8,128]{1,0:T(8,128)}', space=vmem, size = 0x1000, scoped, tag = 'scratch operand']
  %s0 = inlined_call_operand.vmem [shape: f32[2,8,256], index: 0, kind: input, shape index: {}]
  %s1 = inlined_call_operand.vmem [shape: f32[2,8,512], index: 1, kind: input, shape index: {}, may-alias: {1,2}]
  %s2 = inlined_call_operand.vmem [shape: f32[2,8,512], index: 2, kind: input, shape index: {}, may-alias: {1,2}]
  %s3 = inlined_call_operand.vmem [shape: s8[2,1,8,8], index: 3, kind: input, shape index: {}]
  %s4 = inlined_call_operand.vmem [shape: f32[2,8,256], index: 4, kind: output, shape index: {}]
  %s5 = sld [smem:[#allocation0]]
  $region57: #{cross_attention_forward.6} parent=0
    _
  %s7 = ssub.s32 1, %s5
  %s8 = scalar_select 0, %s7, %s5
  loop: start=0, step=1, limit=6
  $region2: #{cross_attention_forward.6} parent=0 // loop_pre_header
    _
  $region3: #{cross_attention_forward.6} parent=0 // loop_header
    %s10 = sphi 0, %s14
    %p11 = scmp.ge.s32.totalorder %s10, 6
    %s17 = sphi 0, %s43
    %s18 = sphi 0, %s39
    %s19 = sphi 0, %s35
    %s20 = sphi 0, %s31
    %s21 = sphi 0, %s17
    %s22 = sphi 0, %s18
    %s23 = sphi 0, %s19
    %s24 = sphi 0, %s20
    %s25 = sphi 0, %s21
    %s26 = sphi 0, %s22
    %s27 = sphi 0, %s23
    %s28 = sphi 0, %s24
    %s50 = sphi 0, %s52
    %s53 = sphi 0, %s50
    %s54 = sphi 0, %s53
    %s70 = sphi 0, %s54
    %s80 = sphi 0, %s82
    %s83 = sphi 0, %s80
    %s84 = sphi 0, %s83
    %s100 = sphi 0, %s84
    %s112 = sphi 0, %s114
    %s115 = sphi 0, %s112
    %s116 = sphi 0, %s115
    %s132 = sphi 0, %s116
    %s142 = sphi 0, %s144
    %s145 = sphi 0, %s142
    %s146 = sphi 0, %s145
    %s162 = sphi 0, %s146
    %s172 = sphi 0, %s174
    %s175 = sphi 0, %s172
    %s176 = sphi 0, %s175
    %s192 = sphi 0, %s176
  $region4: #{cross_attention_forward.6} parent=0 // loop_header_branch
    %13 = sbr.rel (%p11) target = $region8
  $region5: #{cross_attention_forward.6} parent=0 // loop_body
    %s15 = ssub.s32 %s10, 1
    %s16 = ssub.s32 %s10, 2
    %s29 = sadd.s32 1, %s20
    %p30 = scmp.ge.s32.totalorder %s29, 1
    %s31 = scalar_select %p30, 0, %s29
    %s32 = sadd.s32 1, %s19
    %s33 = scalar_select %p30, %s32, %s19
    %p34 = scmp.ge.s32.totalorder %s33, 1
    %s35 = scalar_select %p34, 0, %s33
    %s36 = sadd.s32 1, %s18
    %s37 = scalar_select %p34, %s36, %s18
    %p38 = scmp.ge.s32.totalorder %s37, 2
    %s39 = scalar_select %p38, 0, %s37
    %s40 = sadd.s32 1, %s17
    %s41 = scalar_select %p38, %s40, %s17
    %p42 = scmp.ge.s32.totalorder %s41, 2
    %s43 = scalar_select %p42, 0, %s41
    %s44 = ssub.s32 %s17, %s43
    %s45 = ssub.s32 %s19, %s35
    %s46 = sor.u32 %s44, %s45
    %s47 = ssub.s32 %s18, %s39
    %s48 = sor.u32 %s46, %s47
    %p49 = scmp.eq.s32.totalorder %s48, 0
    %s51 = sadd.s32 %s50, 1
    %s52 = scalar_select %p49, %s50, %s51
    %p55 = pneg %p49
    %p56 = scmp.eq.s32.totalorder %s10, 3
    %p57 = por %p55, %p56
    %p58 = scmp.ne.s32.totalorder %s50, %s53
    %p59 = scmp.eq.s32.totalorder %s10, 0
    %p60 = por %p58, %p59
    %p61 = scmp.ne.s32.totalorder %s50, %s53
    %p62 = scmp.eq.s32.totalorder %s15, 3
    %p63 = por %p61, %p62
    %p64 = scmp.ne.s32.totalorder %s53, %s54
    %p65 = scmp.eq.s32.totalorder %s15, 0
    %p66 = por %p64, %p65
    %p67 = scmp.ne.s32.totalorder %s53, %s54
    %p68 = scmp.eq.s32.totalorder %s16, 3
    %p69 = por %p67, %p68
    %p71 = scmp.ne.s32.totalorder %s54, %s70
    %p72 = scmp.eq.s32.totalorder %s16, 0
    %p73 = por %p71, %p72
    %s74 = ssub.s32 %s17, %s43
    %s75 = ssub.s32 %s20, %s31
    %s76 = sor.u32 %s74, %s75
    %s77 = ssub.s32 %s18, %s39
    %s78 = sor.u32 %s76, %s77
    %p79 = scmp.eq.s32.totalorder %s78, 0
    %s81 = sadd.s32 %s80, 1
    %s82 = scalar_select %p79, %s80, %s81
    %p85 = pneg %p79
    %p86 = scmp.eq.s32.totalorder %s10, 3
    %p87 = por %p85, %p86
    %p88 = scmp.ne.s32.totalorder %s80, %s83
    %p89 = scmp.eq.s32.totalorder %s10, 0
    %p90 = por %p88, %p89
    %p91 = scmp.ne.s32.totalorder %s80, %s83
    %p92 = scmp.eq.s32.totalorder %s15, 3
    %p93 = por %p91, %p92
    %p94 = scmp.ne.s32.totalorder %s83, %s84
    %p95 = scmp.eq.s32.totalorder %s15, 0
    %p96 = por %p94, %p95
    %p97 = scmp.ne.s32.totalorder %s83, %s84
    %p98 = scmp.eq.s32.totalorder %s16, 3
    %p99 = por %p97, %p98
    %p101 = scmp.ne.s32.totalorder %s84, %s100
    %p102 = scmp.eq.s32.totalorder %s16, 0
    %p103 = por %p101, %p102
    %s104 = sadd.s32 %s18, 2
    %s105 = sadd.s32 %s39, 2
    %s106 = ssub.s32 %s17, %s43
    %s107 = ssub.s32 %s20, %s31
    %s108 = sor.u32 %s106, %s107
    %s109 = ssub.s32 %s104, %s105
    %s110 = sor.u32 %s108, %s109
    %p111 = scmp.eq.s32.totalorder %s110, 0
    %s113 = sadd.s32 %s112, 1
    %s114 = scalar_select %p111, %s112, %s113
    %p117 = pneg %p111
    %p118 = scmp.eq.s32.totalorder %s10, 3
    %p119 = por %p117, %p118
    %p120 = scmp.ne.s32.totalorder %s112, %s115
    %p121 = scmp.eq.s32.totalorder %s10, 0
    %p122 = por %p120, %p121
    %p123 = scmp.ne.s32.totalorder %s112, %s115
    %p124 = scmp.eq.s32.totalorder %s15, 3
    %p125 = por %p123, %p124
    %p126 = scmp.ne.s32.totalorder %s115, %s116
    %p127 = scmp.eq.s32.totalorder %s15, 0
    %p128 = por %p126, %p127
    %p129 = scmp.ne.s32.totalorder %s115, %s116
    %p130 = scmp.eq.s32.totalorder %s16, 3
    %p131 = por %p129, %p130
    %p133 = scmp.ne.s32.totalorder %s116, %s132
    %p134 = scmp.eq.s32.totalorder %s16, 0
    %p135 = por %p133, %p134
    %s136 = ssub.s32 %s17, %s43
    %s137 = ssub.s32 %s19, %s35
    %s138 = sor.u32 %s136, %s137
    %s139 = ssub.s32 %s20, %s31
    %s140 = sor.u32 %s138, %s139
    %p141 = scmp.eq.s32.totalorder %s140, 0
    %s143 = sadd.s32 %s142, 1
    %s144 = scalar_select %p141, %s142, %s143
    %p147 = pneg %p141
    %p148 = scmp.eq.s32.totalorder %s10, 3
    %p149 = por %p147, %p148
    %p150 = scmp.ne.s32.totalorder %s142, %s145
    %p151 = scmp.eq.s32.totalorder %s10, 0
    %p152 = por %p150, %p151
    %p153 = scmp.ne.s32.totalorder %s142, %s145
    %p154 = scmp.eq.s32.totalorder %s15, 3
    %p155 = por %p153, %p154
    %p156 = scmp.ne.s32.totalorder %s145, %s146
    %p157 = scmp.eq.s32.totalorder %s15, 0
    %p158 = por %p156, %p157
    %p159 = scmp.ne.s32.totalorder %s145, %s146
    %p160 = scmp.eq.s32.totalorder %s16, 3
    %p161 = por %p159, %p160
    %p163 = scmp.ne.s32.totalorder %s146, %s162
    %p164 = scmp.eq.s32.totalorder %s16, 0
    %p165 = por %p163, %p164
    %s166 = ssub.s32 %s17, %s43
    %s167 = ssub.s32 %s19, %s35
    %s168 = sor.u32 %s166, %s167
    %s169 = ssub.s32 %s18, %s39
    %s170 = sor.u32 %s168, %s169
    %p171 = scmp.eq.s32.totalorder %s170, 0
    %s173 = sadd.s32 %s172, 1
    %s174 = scalar_select %p171, %s172, %s173
    %p177 = pneg %p171
    %p178 = scmp.eq.s32.totalorder %s10, 3
    %p179 = por %p177, %p178
    %p180 = scmp.ne.s32.totalorder %s172, %s175
    %p181 = scmp.eq.s32.totalorder %s10, 0
    %p182 = por %p180, %p181
    %p183 = scmp.ne.s32.totalorder %s172, %s175
    %p184 = scmp.eq.s32.totalorder %s15, 3
    %p185 = por %p183, %p184
    %p186 = scmp.ne.s32.totalorder %s175, %s176
    %p187 = scmp.eq.s32.totalorder %s15, 0
    %p188 = por %p186, %p187
    %p189 = scmp.ne.s32.totalorder %s175, %s176
    %p190 = scmp.eq.s32.totalorder %s16, 3
    %p191 = por %p189, %p190
    %p193 = scmp.ne.s32.totalorder %s176, %s192
    %p194 = scmp.eq.s32.totalorder %s16, 0
    %p195 = por %p193, %p194
    %p196 = scmp.le.s32.totalorder 1, %s10
    %p197 = scmp.lt.s32.totalorder %s10, 5
    %p198 = pnand %p196, %p197
    %p199 = pneg %p198
    // Predicated region
    $region9: #{cross_attention_forward.6} parent=5 // pred_check
      _
    $region10: #{cross_attention_forward.6} parent=5 // pred_check_branch
      %201 = sbr.rel (%p198) target = $region12
    $region11: #{cross_attention_forward.6} parent=5 // pred_region
      %s202 = ssub.s32 %s10, 1
    $region12: #{cross_attention_forward.6} parent=5 // pred_fallthru
      _
    %p203 = scmp.lt.s32.totalorder %s10, 4
    // Predicated region
    $region13: #{cross_attention_forward.6} parent=5 // pred_check
      %p204 = pneg %p203
    $region14: #{cross_attention_forward.6} parent=5 // pred_check_branch
      %206 = sbr.rel (%p204) target = $region16
    $region15: #{cross_attention_forward.6} parent=5 // pred_region
      // Predicated region
      $region17: #{cross_attention_forward.6} parent=15 // pred_check
        %p207 = pneg %p60
      $region18: #{cross_attention_forward.6} parent=15 // pred_check_branch
        %209 = sbr.rel (%p207) target = $region20
      $region19: #{cross_attention_forward.6} parent=15 // pred_region
        %p210 = scmp.lt.s32.totalorder %s17, 1
        %s211 = scalar_select %p210, %s17, 1
        %p212 = scmp.lt.s32.totalorder %s19, 0
        %s213 = scalar_select %p212, %s19, 0
        %p214 = scmp.lt.s32.totalorder %s18, 1
        %s215 = scalar_select %p214, %s18, 1
        %s216 = smul.addr %s213, 2
        %s217 = sadd.s32 %s215, %s216
        %s218 = smul.addr %s211, 2
        %s219 = sadd.s32 %s217, %s218
        %s220 = smul.addr %s219, 8
        %s221 = scalar_lea.vmem %s0, %s220
      $region20: #{cross_attention_forward.6} parent=15 // pred_fallthru
        _
      // Predicated region
      $region21: #{cross_attention_forward.6} parent=15 // pred_check
        %p222 = pneg %p90
      $region22: #{cross_attention_forward.6} parent=15 // pred_check_branch
        %224 = sbr.rel (%p222) target = $region24
      $region23: #{cross_attention_forward.6} parent=15 // pred_region
        %p225 = scmp.lt.s32.totalorder %s17, 1
        %s226 = scalar_select %p225, %s17, 1
        %p227 = scmp.lt.s32.totalorder %s20, 0
        %s228 = scalar_select %p227, %s20, 0
        %p229 = scmp.lt.s32.totalorder %s18, 3
        %s230 = scalar_select %p229, %s18, 3
        %s231 = smul.addr %s228, 4
        %s232 = sadd.s32 %s230, %s231
        %s233 = smul.addr %s226, 4
        %s234 = sadd.s32 %s232, %s233
        %s235 = smul.addr %s234, 8
        %s236 = scalar_lea.vmem %s1, %s235
      $region24: #{cross_attention_forward.6} parent=15 // pred_fallthru
        _
      // Predicated region
      $region25: #{cross_attention_forward.6} parent=15 // pred_check
        %p237 = pneg %p122
      $region26: #{cross_attention_forward.6} parent=15 // pred_check_branch
        %239 = sbr.rel (%p237) target = $region28
      $region27: #{cross_attention_forward.6} parent=15 // pred_region
        %s240 = sadd.s32 %s18, 2
        %p241 = scmp.lt.s32.totalorder %s17, 1
        %s242 = scalar_select %p241, %s17, 1
        %p243 = scmp.lt.s32.totalorder %s20, 0
        %s244 = scalar_select %p243, %s20, 0
        %p245 = scmp.lt.s32.totalorder %s240, 3
        %s246 = scalar_select %p245, %s240, 3
        %s247 = smul.addr %s244, 4
        %s248 = sadd.s32 %s246, %s247
        %s249 = smul.addr %s242, 4
        %s250 = sadd.s32 %s248, %s249
        %s251 = smul.addr %s250, 8
        %s252 = scalar_lea.vmem %s2, %s251
        %s253 = sadd.s32 %s18, 2
      $region28: #{cross_attention_forward.6} parent=15 // pred_fallthru
        _
      // Predicated region
      $region29: #{cross_attention_forward.6} parent=15 // pred_check
        %p254 = pneg %p152
      $region30: #{cross_attention_forward.6} parent=15 // pred_check_branch
        %256 = sbr.rel (%p254) target = $region32
      $region31: #{cross_attention_forward.6} parent=15 // pred_region
        %p257 = scmp.lt.s32.totalorder %s17, 1
        %s258 = scalar_select %p257, %s17, 1
        %p259 = scmp.lt.s32.totalorder %s19, 0
        %s260 = scalar_select %p259, %s19, 0
        %p261 = scmp.lt.s32.totalorder %s20, 0
        %s262 = scalar_select %p261, %s20, 0
        %s263 = sadd.s32 %s262, %s260
        %s264 = sadd.s32 %s263, %s258
        %s265 = smul.addr %s264, 2
        %s266 = scalar_lea.vmem %s3, %s265
      $region32: #{cross_attention_forward.6} parent=15 // pred_fallthru
        _
    $region16: #{cross_attention_forward.6} parent=5 // pred_fallthru
      _
    %p267 = scmp.le.s32.totalorder 1, %s10
    %p268 = scmp.lt.s32.totalorder %s10, 5
    %p269 = pnand %p267, %p268
    %p270 = pneg %p269
    // Predicated region
    $region33: #{cross_attention_forward.6} parent=5 // pred_check
      _
    $region34: #{cross_attention_forward.6} parent=5 // pred_check_branch
      %272 = sbr.rel (%p269) target = $region36
    $region35: #{cross_attention_forward.6} parent=5 // pred_region
      %s273 = ssub.s32 %s10, 1
      %p274 = scmp.lt.s32.totalorder %s21, 1
      %s275 = scalar_select %p274, %s21, 1
      %p276 = scmp.lt.s32.totalorder %s23, 0
      %s277 = scalar_select %p276, %s23, 0
      %p278 = scmp.lt.s32.totalorder %s22, 1
      %s279 = scalar_select %p278, %s22, 1
      %s280 = smul.addr %s277, 2
      %s281 = sadd.s32 %s279, %s280
      %s282 = smul.addr %s275, 2
      %s283 = sadd.s32 %s281, %s282
      %s284 = smul.addr %s283, 8
      %s285 = scalar_lea.vmem %s0, %s284
      %p286 = pneg %p66
      %p287 = pneg %p63
      %p288 = scmp.lt.s32.totalorder %s21, 1
      %s289 = scalar_select %p288, %s21, 1
      %p290 = scmp.lt.s32.totalorder %s24, 0
      %s291 = scalar_select %p290, %s24, 0
      %p292 = scmp.lt.s32.totalorder %s22, 3
      %s293 = scalar_select %p292, %s22, 3
      %s294 = smul.addr %s291, 4
      %s295 = sadd.s32 %s293, %s294
      %s296 = smul.addr %s289, 4
      %s297 = sadd.s32 %s295, %s296
      %s298 = smul.addr %s297, 8
      %s299 = scalar_lea.vmem %s1, %s298
      %p300 = pneg %p96
      %p301 = pneg %p93
      %s302 = sadd.s32 %s22, 2
      %p303 = scmp.lt.s32.totalorder %s21, 1
      %s304 = scalar_select %p303, %s21, 1
      %p305 = scmp.lt.s32.totalorder %s24, 0
      %s306 = scalar_select %p305, %s24, 0
      %p307 = scmp.lt.s32.totalorder %s302, 3
      %s308 = scalar_select %p307, %s302, 3
      %s309 = smul.addr %s306, 4
      %s310 = sadd.s32 %s308, %s309
      %s311 = smul.addr %s304, 4
      %s312 = sadd.s32 %s310, %s311
      %s313 = smul.addr %s312, 8
      %s314 = scalar_lea.vmem %s2, %s313
      %p315 = pneg %p128
      %p316 = pneg %p125
      %p317 = scmp.lt.s32.totalorder %s21, 1
      %s318 = scalar_select %p317, %s21, 1
      %p319 = scmp.lt.s32.totalorder %s23, 0
      %s320 = scalar_select %p319, %s23, 0
      %p321 = scmp.lt.s32.totalorder %s24, 0
      %s322 = scalar_select %p321, %s24, 0
      %s323 = sadd.s32 %s322, %s320
      %s324 = sadd.s32 %s323, %s318
      %s325 = smul.addr %s324, 2
      %s326 = scalar_lea.vmem %s3, %s325
      %p327 = pneg %p158
      %p328 = pneg %p155
      %p329 = pneg %p188
      %p330 = pneg %p185
      %p331 = scmp.lt.s32.totalorder %s21, 1
      %s332 = scalar_select %p331, %s21, 1
      %p333 = scmp.lt.s32.totalorder %s23, 0
      %s334 = scalar_select %p333, %s23, 0
      %p335 = scmp.lt.s32.totalorder %s22, 1
      %s336 = scalar_select %p335, %s22, 1
      %s337 = smul.addr %s334, 2
      %s338 = sadd.s32 %s336, %s337
      %s339 = smul.addr %s332, 2
      %s340 = sadd.s32 %s338, %s339
      %s341 = smul.addr %s340, 8
      %s342 = scalar_lea.vmem %s4, %s341
      %p343 = scmp.lt.s32.totalorder %s21, 1
      %s344 = scalar_select %p343, %s21, 1
      %p345 = scmp.lt.s32.totalorder %s23, 0
      %s346 = scalar_select %p345, %s23, 0
      %p347 = scmp.lt.s32.totalorder %s22, 1
      %s348 = scalar_select %p347, %s22, 1
      %s349 = smul.addr %s346, 2
      %s350 = sadd.s32 %s348, %s349
      %s351 = smul.addr %s344, 2
      %s352 = sadd.s32 %s350, %s351
      %s353 = smul.addr %s352, 8
      %s354 = scalar_lea.vmem %s0, %s353
      %p355 = scmp.lt.s32.totalorder %s21, 1
      %s356 = scalar_select %p355, %s21, 1
      %p357 = scmp.lt.s32.totalorder %s24, 0
      %s358 = scalar_select %p357, %s24, 0
      %p359 = scmp.lt.s32.totalorder %s22, 3
      %s360 = scalar_select %p359, %s22, 3
      %s361 = smul.addr %s358, 4
      %s362 = sadd.s32 %s360, %s361
      %s363 = smul.addr %s356, 4
      %s364 = sadd.s32 %s362, %s363
      %s365 = smul.addr %s364, 8
      %s366 = scalar_lea.vmem %s1, %s365
      %s367 = sadd.s32 %s22, 2
      %p368 = scmp.lt.s32.totalorder %s21, 1
      %s369 = scalar_select %p368, %s21, 1
      %p370 = scmp.lt.s32.totalorder %s24, 0
      %s371 = scalar_select %p370, %s24, 0
      %p372 = scmp.lt.s32.totalorder %s367, 3
      %s373 = scalar_select %p372, %s367, 3
      %s374 = smul.addr %s371, 4
      %s375 = sadd.s32 %s373, %s374
      %s376 = smul.addr %s369, 4
      %s377 = sadd.s32 %s375, %s376
      %s378 = smul.addr %s377, 8
      %s379 = scalar_lea.vmem %s2, %s378
      %s380 = sadd.s32 %s22, 2
      %p381 = scmp.lt.s32.totalorder %s21, 1
      %s382 = scalar_select %p381, %s21, 1
      %p383 = scmp.lt.s32.totalorder %s23, 0
      %s384 = scalar_select %p383, %s23, 0
      %p385 = scmp.lt.s32.totalorder %s24, 0
      %s386 = scalar_select %p385, %s24, 0
      %s387 = sadd.s32 %s386, %s384
      %s388 = sadd.s32 %s387, %s382
      %s389 = smul.addr %s388, 2
      %s390 = scalar_lea.vmem %s3, %s389
      %p391 = scmp.lt.s32.totalorder %s21, 1
      %s392 = scalar_select %p391, %s21, 1
      %p393 = scmp.lt.s32.totalorder %s23, 0
      %s394 = scalar_select %p393, %s23, 0
      %p395 = scmp.lt.s32.totalorder %s22, 1
      %s396 = scalar_select %p395, %s22, 1
      %s397 = smul.addr %s394, 2
      %s398 = sadd.s32 %s396, %s397
      %s399 = smul.addr %s392, 2
      %s400 = sadd.s32 %s398, %s399
      %s401 = smul.addr %s400, 8
      %s402 = scalar_lea.vmem %s4, %s401
      %p405 = scmp.eq.s32.totalorder %s24, 0
      // Predicated region
      $region37: #{cross_attention_forward.6} parent=35 // pred_check
        %p406 = pneg %p405
      $region38: #{cross_attention_forward.6} parent=35 // pred_check_branch
        %408 = sbr.rel (%p406) target = $region40
      $region39: #{cross_attention_forward.6} parent=35 // pred_region
        %vm409 = vcmask 7168
        %410 = vst.msk [vmem:[#allocation2] sm:$0xff] %vm409, -inf
        %411 = vst.msk [vmem:[#allocation3] sm:$0xff] %vm409, 0.0
        %412 = vst [vmem:[#allocation4] sm:$0xff] 0.0
      $region40: #{cross_attention_forward.6} parent=35 // pred_fallthru
        _
      %v413 = vld [vmem:[%s354] sm:$0xff]
      %v414 = vld [vmem:[%s366] sm:$0xff]
      %v415 = vld [vmem:[%s379] sm:$0xff]
      %v416 = vld [vmem:[%s390] sm:$0x3]
      %417 = vmatprep.subr.mxu0 0.0
      %418 = vmatpush1.xpose.msra.mxu0 0.0
      %419 = vmatprep.subr.mxu0 0.0
      %420 = vmatpush1.xpose.msra.mxu0 0.0
      %421 = vmatprep.subr.mxu0 0.0
      %422 = vmatpush1.xpose.msra.mxu0 0.0
      %423 = vmatprep.subr.mxu0 0.0
      %424 = vmatpush1.xpose.msra.mxu0 0.0
      %425 = vmatprep.subr.mxu0 0.0
      %426 = vmatpush1.xpose.msra.mxu0 0.0
      %427 = vmatprep.subr.mxu0 0.0
      %428 = vmatpush1.xpose.msra.mxu0 0.0
      %429 = vmatprep.subr.mxu0 0.0
      %430 = vmatpush1.xpose.msra.mxu0 0.0
      %431 = vmatprep.subr.mxu0 0.0
      %432 = vmatpush1.xpose.msra.mxu0 0.0
      %433 = vmatprep.subr.mxu0 0.0
      %434 = vmatpush1.xpose.msra.mxu0 0.0
      %435 = vmatprep.subr.mxu0 0.0
      %436 = vmatpush1.xpose.msra.mxu0 0.0
      %437 = vmatprep.subr.mxu0 0.0
      %438 = vmatpush1.xpose.msra.mxu0 0.0
      %439 = vmatprep.subr.mxu0 0.0
      %440 = vmatpush1.xpose.msra.mxu0 0.0
      %441 = vmatprep.subr.mxu0 0.0
      %442 = vmatpush1.xpose.msra.mxu0 0.0
      %443 = vmatprep.subr.mxu0 0.0
      %444 = vmatpush1.xpose.msra.mxu0 0.0
      %445 = vmatprep.subr.mxu0 0.0
      %446 = vmatpush1.xpose.msra.mxu0 0.0
      %447 = vmatprep.subr.mxu0 0.0
      %448 = vmatpush1.xpose.msra.mxu0 %v414
      %449 = vmatprep.subr.mxu0 0.0
      %450 = vmatpush2.xpose.msra.mxu0 0.0
      %451 = vmatprep.subr.mxu0 0.0
      %452 = vmatpush2.xpose.msra.mxu0 0.0
      %453 = vmatprep.subr.mxu0 0.0
      %454 = vmatpush2.xpose.msra.mxu0 0.0
      %455 = vmatprep.subr.mxu0 0.0
      %456 = vmatpush2.xpose.msra.mxu0 0.0
      %457 = vmatprep.subr.mxu0 0.0
      %458 = vmatpush2.xpose.msra.mxu0 0.0
      %459 = vmatprep.subr.mxu0 0.0
      %460 = vmatpush2.xpose.msra.mxu0 0.0
      %461 = vmatprep.subr.mxu0 0.0
      %462 = vmatpush2.xpose.msra.mxu0 0.0
      %463 = vmatprep.subr.mxu0 0.0
      %464 = vmatpush2.xpose.msra.mxu0 0.0
      %465 = vmatprep.subr.mxu0 0.0
      %466 = vmatpush2.xpose.msra.mxu0 0.0
      %467 = vmatprep.subr.mxu0 0.0
      %468 = vmatpush2.xpose.msra.mxu0 0.0
      %469 = vmatprep.subr.mxu0 0.0
      %470 = vmatpush2.xpose.msra.mxu0 0.0
      %471 = vmatprep.subr.mxu0 0.0
      %472 = vmatpush2.xpose.msra.mxu0 0.0
      %473 = vmatprep.subr.mxu0 0.0
      %474 = vmatpush2.xpose.msra.mxu0 0.0
      %475 = vmatprep.subr.mxu0 0.0
      %476 = vmatpush2.xpose.msra.mxu0 0.0
      %477 = vmatprep.subr.mxu0 0.0
      %478 = vmatpush2.xpose.msra.mxu0 0.0
      %479 = vmatprep.subr.mxu0 0.0
      %480 = vmatpush2.xpose.msra.mxu0 0.0
      %481 = vmatprep.mubr.f32.mxu0 0.0
      %482 = vmatmul.mubr.f32.gmra.mxu0 %v413
      %v483 = vpop.f32.mrf.mxu0
      %v484 = vadd.f32 0.0, %v483
      %v485 = vpop.f32.mrf.mxu0
      %486 = vdwg.mxu0
      %vm487 = vnez %v416
      %v488 = vsel %vm487, 16843009, 0
      %v489 = vunpack.c.0.s8 %v488
      %vm490 = vcmp.ne.s32.totalorder %v489, 0
      %v491 = vsel %vm490, %v484, -10000.0
      %v492 = vld [vmem:[#allocation2] sm:$0xff]
      %vm493 = vcmask 64512
      %v494 = vsel %vm493, %v491, -inf
      %495 = vmax.xlane.f32.xlu0 %v494
      %v496 = vpop.xlane.xlu0 %495
      %v497 = vmax.f32 %v492, %v496
      %v498 = vsub.f32 %v492, %v497
      %v499 = vmul.f32 %v498, 1.442695
      %v500 = vpow.pop %v499
      %502 = vset.pattern.permute.xlu0 0
      %503 = vperm.xlu0 %502, %v497
      %v504 = vpop.permute.xlu0 %503
      %v506 = vsub.f32 %v491, %v504
      %v507 = vmul.f32 %v506, 1.442695
      %v508 = vpow.pop %v507
      %v509 = vld [vmem:[#allocation3] sm:$0xff]
      %v510 = vmul.f32 %v500, %v509
      %v511 = vsel %vm493, %v508, 0.0
      %512 = vadd.xlane.f32.xlu0 %v511
      %v513 = vpop.xlane.xlu0 %512
      %v514 = vadd.f32 %v510, %v513
      %vm515 = vcmask 7168
      %516 = vst.msk [vmem:[#allocation3] sm:$0xff] %vm515, %v514
      %v517 = vld [vmem:[#allocation4] sm:$0xff]
      %519 = vset.pattern.permute.xlu0 0
      %520 = vperm.xlu0 %519, %v500
      %v521 = vpop.permute.xlu0 %520
      %v523 = vmul.f32 %v521, %v517
      %v525 = vsel %vm493, %v508, 0
      %527 = vmatprep.subr.mxu0 0.0
      %528 = vmatpush1.msra.mxu0 0.0
      %529 = vmatprep.subr.mxu0 0.0
      %530 = vmatpush1.msra.mxu0 0.0
      %531 = vmatprep.subr.mxu0 0.0
      %532 = vmatpush1.msra.mxu0 0.0
      %533 = vmatprep.subr.mxu0 0.0
      %534 = vmatpush1.msra.mxu0 0.0
      %535 = vmatprep.subr.mxu0 0.0
      %536 = vmatpush1.msra.mxu0 0.0
      %537 = vmatprep.subr.mxu0 0.0
      %538 = vmatpush1.msra.mxu0 0.0
      %539 = vmatprep.subr.mxu0 0.0
      %540 = vmatpush1.msra.mxu0 0.0
      %541 = vmatprep.subr.mxu0 0.0
      %542 = vmatpush1.msra.mxu0 0.0
      %543 = vmatprep.subr.mxu0 0.0
      %544 = vmatpush1.msra.mxu0 0.0
      %545 = vmatprep.subr.mxu0 0.0
      %546 = vmatpush1.msra.mxu0 0.0
      %547 = vmatprep.subr.mxu0 0.0
      %548 = vmatpush1.msra.mxu0 0.0
      %549 = vmatprep.subr.mxu0 0.0
      %550 = vmatpush1.msra.mxu0 0.0
      %551 = vmatprep.subr.mxu0 0.0
      %552 = vmatpush1.msra.mxu0 0.0
      %553 = vmatprep.subr.mxu0 0.0
      %554 = vmatpush1.msra.mxu0 0.0
      %555 = vmatprep.subr.mxu0 0.0
      %556 = vmatpush1.msra.mxu0 0.0
      %557 = vmatprep.subr.mxu0 0.0
      %558 = vmatpush1.msra.mxu0 %v415
      %559 = vmatprep.subr.mxu0 0.0
      %560 = vmatpush2.msra.mxu0 0.0
      %561 = vmatprep.subr.mxu0 0.0
      %562 = vmatpush2.msra.mxu0 0.0
      %563 = vmatprep.subr.mxu0 0.0
      %564 = vmatpush2.msra.mxu0 0.0
      %565 = vmatprep.subr.mxu0 0.0
      %566 = vmatpush2.msra.mxu0 0.0
      %567 = vmatprep.subr.mxu0 0.0
      %568 = vmatpush2.msra.mxu0 0.0
      %569 = vmatprep.subr.mxu0 0.0
      %570 = vmatpush2.msra.mxu0 0.0
      %571 = vmatprep.subr.mxu0 0.0
      %572 = vmatpush2.msra.mxu0 0.0
      %573 = vmatprep.subr.mxu0 0.0
      %574 = vmatpush2.msra.mxu0 0.0
      %575 = vmatprep.subr.mxu0 0.0
      %576 = vmatpush2.msra.mxu0 0.0
      %577 = vmatprep.subr.mxu0 0.0
      %578 = vmatpush2.msra.mxu0 0.0
      %579 = vmatprep.subr.mxu0 0.0
      %580 = vmatpush2.msra.mxu0 0.0
      %581 = vmatprep.subr.mxu0 0.0
      %582 = vmatpush2.msra.mxu0 0.0
      %583 = vmatprep.subr.mxu0 0.0
      %584 = vmatpush2.msra.mxu0 0.0
      %585 = vmatprep.subr.mxu0 0.0
      %586 = vmatpush2.msra.mxu0 0.0
      %587 = vmatprep.subr.mxu0 0.0
      %588 = vmatpush2.msra.mxu0 0.0
      %589 = vmatprep.subr.mxu0 0.0
      %590 = vmatpush2.msra.mxu0 0.0
      %591 = vmatprep.mubr.f32.mxu0 0.0
      %592 = vmatmul.mubr.f32.gmra.mxu0 %v525
      %v593 = vpop.f32.mrf.mxu0
      %v594 = vadd.f32 0.0, %v593
      %v595 = vpop.f32.mrf.mxu0
      %596 = vdwg.mxu0
      %v597 = vadd.f32 %v523, %v594
      %598 = vst [vmem:[#allocation4] sm:$0xff] %v597
      %599 = vst.msk [vmem:[#allocation2] sm:$0xff] %vm515, %v497
      // Predicated region
      $region41: #{cross_attention_forward.6} parent=35 // pred_check
        %p600 = pneg %p405
      $region42: #{cross_attention_forward.6} parent=35 // pred_check_branch
        %602 = sbr.rel (%p600) target = $region44
      $region43: #{cross_attention_forward.6} parent=35 // pred_region
        %v603 = vld [vmem:[#allocation3] sm:$0xff]
        %v604 = vrcp.pop %v603
        %v605 = vld [vmem:[#allocation4] sm:$0xff]
        %607 = vset.pattern.permute.xlu0 0
        %608 = vperm.xlu0 %607, %v604
        %v609 = vpop.permute.xlu0 %608
        %v611 = vmul.f32 %v605, %v609
        %612 = vst [vmem:[%s402] sm:$0xff] %v611
      $region44: #{cross_attention_forward.6} parent=35 // pred_fallthru
        _
      %p613 = scmp.lt.s32.totalorder %s21, 1
      %s614 = scalar_select %p613, %s21, 1
      %p615 = scmp.lt.s32.totalorder %s23, 0
      %s616 = scalar_select %p615, %s23, 0
      %p617 = scmp.lt.s32.totalorder %s22, 1
      %s618 = scalar_select %p617, %s22, 1
      %s619 = smul.addr %s616, 2
      %s620 = sadd.s32 %s618, %s619
      %s621 = smul.addr %s614, 2
      %s622 = sadd.s32 %s620, %s621
      %s623 = smul.addr %s622, 8
      %s624 = scalar_lea.vmem %s4, %s623
      // Predicated region
      $region45: #{cross_attention_forward.6} parent=35 // pred_check
        %p625 = pneg %p185
      $region46: #{cross_attention_forward.6} parent=35 // pred_check_branch
        %627 = sbr.rel (%p625) target = $region48
      $region47: #{cross_attention_forward.6} parent=35 // pred_region
        _
      $region48: #{cross_attention_forward.6} parent=35 // pred_fallthru
        _
    $region36: #{cross_attention_forward.6} parent=5 // pred_fallthru
      _
    %p628 = scmp.le.s32.totalorder 2, %s10
    // Predicated region
    $region49: #{cross_attention_forward.6} parent=5 // pred_check
      %p629 = pneg %p628
    $region50: #{cross_attention_forward.6} parent=5 // pred_check_branch
      %631 = sbr.rel (%p629) target = $region52
    $region51: #{cross_attention_forward.6} parent=5 // pred_region
      %s632 = ssub.s32 %s10, 2
      // Predicated region
      $region53: #{cross_attention_forward.6} parent=51 // pred_check
        %p633 = pneg %p191
      $region54: #{cross_attention_forward.6} parent=51 // pred_check_branch
        %635 = sbr.rel (%p633) target = $region56
      $region55: #{cross_attention_forward.6} parent=51 // pred_region
        %p636 = scmp.lt.s32.totalorder %s25, 1
        %s637 = scalar_select %p636, %s25, 1
        %p638 = scmp.lt.s32.totalorder %s27, 0
        %s639 = scalar_select %p638, %s27, 0
        %p640 = scmp.lt.s32.totalorder %s26, 1
        %s641 = scalar_select %p640, %s26, 1
        %s642 = smul.addr %s639, 2
        %s643 = sadd.s32 %s641, %s642
        %s644 = smul.addr %s637, 2
        %s645 = sadd.s32 %s643, %s644
        %s646 = smul.addr %s645, 8
        %s647 = scalar_lea.vmem %s4, %s646
      $region56: #{cross_attention_forward.6} parent=51 // pred_fallthru
        _
    $region52: #{cross_attention_forward.6} parent=5 // pred_fallthru
      _
  $region6: #{cross_attention_forward.6} parent=0 // loop_footer
    %s14 = sadd.s32 1, %s10
  $region7: #{cross_attention_forward.6} parent=0 // loop_footer_branch
    %9 = sbr.rel target = $region3
  $region8: #{cross_attention_forward.6} parent=0 // loop_exit
    _

</llo_original>
